<compile_context>
chip_gen: v6e
topology: v6e:2x2x1
jax: 0.10.0
libtpu: 0.0.40
codegen_flags: <defaults>
</compile_context>

<pallas_src>
import functools

import jax
import jax.numpy as jnp
from jax import lax
from jax.experimental import pallas as pl
from jax.experimental.pallas import tpu as pltpu


def _round_up(x, m):
    return (x + m - 1) // m * m


def combine_stack_kernel(x_ref, wih_ref, whh_ref, b_ref, wout_ref, bout_ref,
                         o_ref, h_sc, c_sc, gx_sc, hh_sc):
    """One T-chunk of LSTM + Linear + sigmoid.

    x_ref:    (Tc, Bp, 2F) time-major input chunk.
    wih_ref:  (2F, 4H); whh_ref: (H, 4H); b_ref: (1, 4H) = b_ih + b_hh
              (PyTorch gate order i, f, g, o).
    wout_ref: (H, F); bout_ref: (1, F).
    o_ref:    (Tc, Bp, F) time-major output chunk.
    h_sc/c_sc: (Bp, H) recurrent state, persists across grid steps.
    gx_sc:    (Tc, Bp, 4H) hoisted input-projection gates for this chunk.
    hh_sc:    (Tc, Bp, H) hidden-state history for this chunk.
    """
    Tc, Bp, F2 = x_ref.shape
    H = h_sc.shape[1]
    F = o_ref.shape[2]

    # Zero initial (h, c) -- PyTorch default when no (h0, c0) is passed.
    @pl.when(pl.program_id(0) == 0)
    def _():
        h_sc[...] = jnp.zeros_like(h_sc)
        c_sc[...] = jnp.zeros_like(c_sc)

    # ---- Hoisted input projection: ONE MXU matmul for the whole chunk. ----
    x_flat = x_ref[...].reshape(Tc * Bp, F2)
    gx = jnp.dot(x_flat, wih_ref[...], preferred_element_type=jnp.float32)
    gx = gx + b_ref[...]
    gx_sc[...] = gx.reshape(Tc, Bp, 4 * H)

    # Loop-invariant recurrent weight: load once, keep in registers.
    w_hh = whh_ref[...]

    # ---- Sequential recurrence: only h @ W_hh + elementwise per step. ----
    def step(t, carry):
        gates = gx_sc[t] + jnp.dot(h_sc[...], w_hh,
                                   preferred_element_type=jnp.float32)
        i_g = jax.nn.sigmoid(gates[:, 0 * H:1 * H])
        f_g = jax.nn.sigmoid(gates[:, 1 * H:2 * H])
        g_g = jnp.tanh(gates[:, 2 * H:3 * H])
        o_g = jax.nn.sigmoid(gates[:, 3 * H:4 * H])
        c_new = f_g * c_sc[...] + i_g * g_g
        h_new = o_g * jnp.tanh(c_new)
        c_sc[...] = c_new
        h_sc[...] = h_new
        hh_sc[t] = h_new
        return carry

    lax.fori_loop(0, Tc, step, 0, unroll=True)

    # ---- Hoisted output projection + sigmoid + single store per chunk. ----
    h_all = hh_sc[...].reshape(Tc * Bp, H)
    y = jnp.dot(h_all, wout_ref[...], preferred_element_type=jnp.float32)
    y = jax.nn.sigmoid(y + bout_ref[...])
    o_ref[...] = y.reshape(Tc, Bp, F).astype(o_ref.dtype)


def combine_stack_forward(x, params, *, t_chunk=32):
    """x: (B, T, 2*output_features) float32. Returns (B, T, output_features)."""
    B, T, F2 = x.shape
    H = params["w_hh"].shape[0]
    F = params["w_out"].shape[1]

    Bp = _round_up(max(B, 8), 8)       # pad batch to sublane granularity
    Tc = min(t_chunk, T)               # T-chunk size (leading, untiled dim)
    T_pad = _round_up(T, Tc)

    xp = x
    if Bp != B or T_pad != T:
        xp = jnp.pad(x, ((0, Bp - B), (0, T_pad - T), (0, 0)))
    # Time-major for the kernel so the recurrence indexes the leading axis.
    # TODO(synk): for very long sequences this (and the output transpose)
    # could be fused into an XLA-side projection to avoid extra HBM passes.
    x_tm = jnp.transpose(xp, (1, 0, 2))            # (T_pad, Bp, 2F)

    grid = (T_pad // Tc,)
    out_tm = pl.pallas_call(
        combine_stack_kernel,
        grid=grid,
        in_specs=[
            pl.BlockSpec((Tc, Bp, F2), lambda ct: (ct, 0, 0)),
            pl.BlockSpec((F2, 4 * H), lambda ct: (0, 0)),
            pl.BlockSpec((H, 4 * H), lambda ct: (0, 0)),
            pl.BlockSpec((1, 4 * H), lambda ct: (0, 0)),
            pl.BlockSpec((H, F), lambda ct: (0, 0)),
            pl.BlockSpec((1, F), lambda ct: (0, 0)),
        ],
        out_specs=pl.BlockSpec((Tc, Bp, F), lambda ct: (ct, 0, 0)),
        out_shape=jax.ShapeDtypeStruct((T_pad, Bp, F), x.dtype),
        scratch_shapes=[
            pltpu.VMEM((Bp, H), jnp.float32),          # h state (carried)
            pltpu.VMEM((Bp, H), jnp.float32),          # c state (carried)
            pltpu.VMEM((Tc, Bp, 4 * H), jnp.float32),  # hoisted x-gates
            pltpu.VMEM((Tc, Bp, H), jnp.float32),      # h history
        ],
        compiler_params=pltpu.CompilerParams(
            dimension_semantics=("arbitrary",),        # sequential recurrence
        ),
    )(x_tm, params["w_ih"], params["w_hh"], params["b"],
      params["w_out"], params["b_out"])

    out = jnp.transpose(out_tm, (1, 0, 2))             # (Bp, T_pad, F)
    return out[:B, :T, :]


def init_params(key, model_size, output_features, dtype=jnp.float32):
    """Deterministic synthetic parameters (PyTorch-style U(-1/sqrt(H), 1/sqrt(H)))."""
    in_feat = output_features * 2
    H = model_size
    ks = jax.random.split(key, 6)
    s = 1.0 / float(jnp.sqrt(H))
    w_ih = jax.random.uniform(ks[0], (in_feat, 4 * H), dtype, -s, s)
    w_hh = jax.random.uniform(ks[1], (H, 4 * H), dtype, -s, s)
    b_ih = jax.random.uniform(ks[2], (1, 4 * H), dtype, -s, s)
    b_hh = jax.random.uniform(ks[3], (1, 4 * H), dtype, -s, s)
    w_out = jax.random.uniform(ks[4], (H, output_features), dtype, -s, s)
    b_out = jax.random.uniform(ks[5], (1, output_features), dtype, -s, s)
    return dict(w_ih=w_ih, w_hh=w_hh, b=b_ih + b_hh, w_out=w_out, b_out=b_out)


def reference_forward(x, params):
    """Pure-JAX reference for correctness checking."""
    B, T, _ = x.shape
    H = params["w_hh"].shape[0]

    def cell(carry, x_t):
        h, c = carry
        gates = x_t @ params["w_ih"] + h @ params["w_hh"] + params["b"][0]
        i = jax.nn.sigmoid(gates[:, :H])
        f = jax.nn.sigmoid(gates[:, H:2 * H])
        g = jnp.tanh(gates[:, 2 * H:3 * H])
        o = jax.nn.sigmoid(gates[:, 3 * H:])
        c = f * c + i * g
        h = o * jnp.tanh(c)
        return (h, c), h

    h0 = jnp.zeros((B, H), x.dtype)
    c0 = jnp.zeros((B, H), x.dtype)
    _, hs = lax.scan(cell, (h0, c0), jnp.transpose(x, (1, 0, 2)))
    hs = jnp.transpose(hs, (1, 0, 2))  # (B, T, H)
    return jax.nn.sigmoid(hs @ params["w_out"] + params["b_out"][0])


if __name__ == "__main__":
    # Small shapes consistent with the module:
    #   output_features = 4  -> LSTM input size = 8
    #   model_size (hidden)  = 32  -> 4H = 128 (full lane width)
    #   batch = 2, seq = 8
    model_size = 32
    output_features = 4
    B, T = 2, 8

    key = jax.random.PRNGKey(0)
    k_x, k_p = jax.random.split(key)
    x = jax.random.normal(k_x, (B, T, output_features * 2), jnp.float32)
    params = init_params(k_p, model_size, output_features)

    fwd = jax.jit(functools.partial(combine_stack_forward, t_chunk=32))
    out = fwd(x, params)
    out = jax.block_until_ready(out)

    ref = reference_forward(x, params)
    assert out.shape == (B, T, output_features), out.shape
    assert jnp.allclose(out, ref, atol=1e-4, rtol=1e-4), (
        float(jnp.max(jnp.abs(out - ref))))

    print("KERNEL_OK")
</pallas_src>

<mosaic_0001>
module attributes {stable_mosaic.version = 11 : i64} {
  func.func @combine_stack_kernel(%arg0: i32, %arg1: memref<8x8x8xf32, #tpu.memory_space<vmem>>, %arg2: memref<8x128xf32, #tpu.memory_space<vmem>>, %arg3: memref<32x128xf32, #tpu.memory_space<vmem>>, %arg4: memref<1x128xf32, #tpu.memory_space<vmem>>, %arg5: memref<32x4xf32, #tpu.memory_space<vmem>>, %arg6: memref<1x4xf32, #tpu.memory_space<vmem>>, %arg7: memref<8x8x4xf32, #tpu.memory_space<vmem>>, %arg8: memref<8x32xf32, #tpu.memory_space<vmem>>, %arg9: memref<8x32xf32, #tpu.memory_space<vmem>>, %arg10: memref<8x8x128xf32, #tpu.memory_space<vmem>>, %arg11: memref<8x8x32xf32, #tpu.memory_space<vmem>>) attributes {dimension_semantics = [#tpu.dimension_semantics<arbitrary>], iteration_bounds = array<i64: 1>, scalar_prefetch = 0 : i64, scratch_operands = 4 : i64, tpu.core_type = #tpu.core_type<tc>, window_params = [{transform_indices = @transform_0, window_bounds = array<i64: 8, 8, 8>}, {pipeline_mode = #tpu.pipeline_mode<synchronous>, transform_indices = @transform_1, window_bounds = array<i64: 8, 128>}, {pipeline_mode = #tpu.pipeline_mode<synchronous>, transform_indices = @transform_2, window_bounds = array<i64: 32, 128>}, {pipeline_mode = #tpu.pipeline_mode<synchronous>, transform_indices = @transform_3, window_bounds = array<i64: 1, 128>}, {pipeline_mode = #tpu.pipeline_mode<synchronous>, transform_indices = @transform_4, window_bounds = array<i64: 32, 4>}, {pipeline_mode = #tpu.pipeline_mode<synchronous>, transform_indices = @transform_5, window_bounds = array<i64: 1, 4>}, {transform_indices = @transform_6, window_bounds = array<i64: 8, 8, 4>}]} {
    %c0_i32 = arith.constant 0 : i32
    %0 = arith.cmpi eq, %arg0, %c0_i32 : i32
    %1 = arith.extui %0 : i1 to i32
    %c0_i32_0 = arith.constant 0 : i32
    %2 = arith.cmpi ne, %1, %c0_i32_0 : i32
    scf.if %2 {
      %cst_153 = arith.constant 0.000000e+00 : f32
      %331 = vector.broadcast %cst_153 : f32 to vector<8x32xf32>
      %c0_154 = arith.constant 0 : index
      %c0_155 = arith.constant 0 : index
      %332 = vector.load %arg8[%c0_154, %c0_155] : memref<8x32xf32, #tpu.memory_space<vmem>>, vector<8x32xf32>
      tpu.vector_store %arg8[%c0_154, %c0_155], %331 {strides = array<i32>} : memref<8x32xf32, #tpu.memory_space<vmem>>, vector<8x32xf32>,
      %cst_156 = arith.constant 0.000000e+00 : f32
      %333 = vector.broadcast %cst_156 : f32 to vector<8x32xf32>
      %c0_157 = arith.constant 0 : index
      %c0_158 = arith.constant 0 : index
      %334 = vector.load %arg9[%c0_157, %c0_158] : memref<8x32xf32, #tpu.memory_space<vmem>>, vector<8x32xf32>
      tpu.vector_store %arg9[%c0_157, %c0_158], %333 {strides = array<i32>} : memref<8x32xf32, #tpu.memory_space<vmem>>, vector<8x32xf32>,
    } else {
    }
    %c0 = arith.constant 0 : index
    %c0_1 = arith.constant 0 : index
    %c0_2 = arith.constant 0 : index
    %3 = vector.load %arg1[%c0, %c0_1, %c0_2] : memref<8x8x8xf32, #tpu.memory_space<vmem>>, vector<8x8x8xf32>
    %4 = vector.shape_cast %3 : vector<8x8x8xf32> to vector<64x8xf32>
    %c0_3 = arith.constant 0 : index
    %c0_4 = arith.constant 0 : index
    %5 = vector.load %arg2[%c0_3, %c0_4] : memref<8x128xf32, #tpu.memory_space<vmem>>, vector<8x128xf32>
    %cst = arith.constant dense<0.000000e+00> : vector<64x128xf32>
    %6 = tpu.matmul %4, %5, %cst {dimension_numbers = #tpu.dot_dimension_numbers<[1], [0], [0], [1], [0, 0, 1, 1], [], []>} : vector<64x8xf32>, vector<8x128xf32>, vector<64x128xf32> -> vector<64x128xf32>
    %c0_5 = arith.constant 0 : index
    %c0_6 = arith.constant 0 : index
    %7 = vector.load %arg4[%c0_5, %c0_6] : memref<1x128xf32, #tpu.memory_space<vmem>>, vector<1x128xf32>
    %8 = vector.broadcast %7 : vector<1x128xf32> to vector<64x128xf32>
    %9 = arith.addf %6, %8 : vector<64x128xf32>
    %10 = vector.shape_cast %9 : vector<64x128xf32> to vector<8x8x128xf32>
    %c0_7 = arith.constant 0 : index
    %c0_8 = arith.constant 0 : index
    %c0_9 = arith.constant 0 : index
    %11 = vector.load %arg10[%c0_7, %c0_8, %c0_9] : memref<8x8x128xf32, #tpu.memory_space<vmem>>, vector<8x8x128xf32>
    tpu.vector_store %arg10[%c0_7, %c0_8, %c0_9], %10 {strides = array<i32>} : memref<8x8x128xf32, #tpu.memory_space<vmem>>, vector<8x8x128xf32>,
    %c0_10 = arith.constant 0 : index
    %c0_11 = arith.constant 0 : index
    %12 = vector.load %arg3[%c0_10, %c0_11] : memref<32x128xf32, #tpu.memory_space<vmem>>, vector<32x128xf32>
    %c0_i32_12 = arith.constant 0 : i32
    %13 = arith.index_cast %c0_i32_12 : i32 to index
    %c0_13 = arith.constant 0 : index
    %c0_14 = arith.constant 0 : index
    %14 = vector.load %arg10[%13, %c0_13, %c0_14] : memref<8x8x128xf32, #tpu.memory_space<vmem>>, vector<1x8x128xf32>
    %15 = vector.shape_cast %14 : vector<1x8x128xf32> to vector<8x128xf32>
    %c0_15 = arith.constant 0 : index
    %c0_16 = arith.constant 0 : index
    %16 = vector.load %arg8[%c0_15, %c0_16] : memref<8x32xf32, #tpu.memory_space<vmem>>, vector<8x32xf32>
    %cst_17 = arith.constant dense<0.000000e+00> : vector<8x128xf32>
    %17 = tpu.matmul %16, %12, %cst_17 {dimension_numbers = #tpu.dot_dimension_numbers<[1], [0], [0], [1], [0, 0, 1, 1], [], []>} : vector<8x32xf32>, vector<32x128xf32>, vector<8x128xf32> -> vector<8x128xf32>
    %18 = arith.addf %15, %17 : vector<8x128xf32>
    %19 = vector.extract_strided_slice %18 {offsets = [0, 0], sizes = [8, 32], strides = [1, 1]} : vector<8x128xf32> to vector<8x32xf32>
    %20 = arith.negf %19 : vector<8x32xf32>
    %21 = math.exp %20 : vector<8x32xf32>
    %cst_18 = arith.constant 1.000000e+00 : f32
    %22 = vector.broadcast %cst_18 : f32 to vector<8x32xf32>
    %23 = arith.addf %22, %21 : vector<8x32xf32>
    %24 = arith.divf %22, %23 : vector<8x32xf32>
    %25 = vector.extract_strided_slice %18 {offsets = [0, 32], sizes = [8, 32], strides = [1, 1]} : vector<8x128xf32> to vector<8x32xf32>
    %26 = arith.negf %25 : vector<8x32xf32>
    %27 = math.exp %26 : vector<8x32xf32>
    %cst_19 = arith.constant 1.000000e+00 : f32
    %28 = vector.broadcast %cst_19 : f32 to vector<8x32xf32>
    %29 = arith.addf %28, %27 : vector<8x32xf32>
    %30 = arith.divf %28, %29 : vector<8x32xf32>
    %31 = vector.extract_strided_slice %18 {offsets = [0, 64], sizes = [8, 32], strides = [1, 1]} : vector<8x128xf32> to vector<8x32xf32>
    %32 = math.tanh %31 : vector<8x32xf32>
    %33 = vector.extract_strided_slice %18 {offsets = [0, 96], sizes = [8, 32], strides = [1, 1]} : vector<8x128xf32> to vector<8x32xf32>
    %34 = arith.negf %33 : vector<8x32xf32>
    %35 = math.exp %34 : vector<8x32xf32>
    %cst_20 = arith.constant 1.000000e+00 : f32
    %36 = vector.broadcast %cst_20 : f32 to vector<8x32xf32>
    %37 = arith.addf %36, %35 : vector<8x32xf32>
    %38 = arith.divf %36, %37 : vector<8x32xf32>
    %c0_21 = arith.constant 0 : index
    %c0_22 = arith.constant 0 : index
    %39 = vector.load %arg9[%c0_21, %c0_22] : memref<8x32xf32, #tpu.memory_space<vmem>>, vector<8x32xf32>
    %40 = arith.mulf %30, %39 : vector<8x32xf32>
    %41 = arith.mulf %24, %32 : vector<8x32xf32>
    %42 = arith.addf %40, %41 : vector<8x32xf32>
    %43 = math.tanh %42 : vector<8x32xf32>
    %44 = arith.mulf %38, %43 : vector<8x32xf32>
    %c0_23 = arith.constant 0 : index
    %c0_24 = arith.constant 0 : index
    %45 = vector.load %arg9[%c0_23, %c0_24] : memref<8x32xf32, #tpu.memory_space<vmem>>, vector<8x32xf32>
    tpu.vector_store %arg9[%c0_23, %c0_24], %42 {strides = array<i32>} : memref<8x32xf32, #tpu.memory_space<vmem>>, vector<8x32xf32>,
    %c0_25 = arith.constant 0 : index
    %c0_26 = arith.constant 0 : index
    %46 = vector.load %arg8[%c0_25, %c0_26] : memref<8x32xf32, #tpu.memory_space<vmem>>, vector<8x32xf32>
    tpu.vector_store %arg8[%c0_25, %c0_26], %44 {strides = array<i32>} : memref<8x32xf32, #tpu.memory_space<vmem>>, vector<8x32xf32>,
    %47 = arith.index_cast %c0_i32_12 : i32 to index
    %c0_27 = arith.constant 0 : index
    %c0_28 = arith.constant 0 : index
    %48 = vector.load %arg11[%47, %c0_27, %c0_28] : memref<8x8x32xf32, #tpu.memory_space<vmem>>, vector<1x8x32xf32>
    %49 = vector.shape_cast %48 : vector<1x8x32xf32> to vector<8x32xf32>
    %50 = vector.shape_cast %44 : vector<8x32xf32> to vector<1x8x32xf32>
    tpu.vector_store %arg11[%47, %c0_27, %c0_28], %50 {strides = array<i32>} : memref<8x8x32xf32, #tpu.memory_space<vmem>>, vector<1x8x32xf32>,
    %c1_i32 = arith.constant 1 : i32
    %51 = arith.index_cast %c1_i32 : i32 to index
    %c0_29 = arith.constant 0 : index
    %c0_30 = arith.constant 0 : index
    %52 = vector.load %arg10[%51, %c0_29, %c0_30] : memref<8x8x128xf32, #tpu.memory_space<vmem>>, vector<1x8x128xf32>
    %53 = vector.shape_cast %52 : vector<1x8x128xf32> to vector<8x128xf32>
    %c0_31 = arith.constant 0 : index
    %c0_32 = arith.constant 0 : index
    %54 = vector.load %arg8[%c0_31, %c0_32] : memref<8x32xf32, #tpu.memory_space<vmem>>, vector<8x32xf32>
    %cst_33 = arith.constant dense<0.000000e+00> : vector<8x128xf32>
    %55 = tpu.matmul %54, %12, %cst_33 {dimension_numbers = #tpu.dot_dimension_numbers<[1], [0], [0], [1], [0, 0, 1, 1], [], []>} : vector<8x32xf32>, vector<32x128xf32>, vector<8x128xf32> -> vector<8x128xf32>
    %56 = arith.addf %53, %55 : vector<8x128xf32>
    %57 = vector.extract_strided_slice %56 {offsets = [0, 0], sizes = [8, 32], strides = [1, 1]} : vector<8x128xf32> to vector<8x32xf32>
    %58 = arith.negf %57 : vector<8x32xf32>
    %59 = math.exp %58 : vector<8x32xf32>
    %cst_34 = arith.constant 1.000000e+00 : f32
    %60 = vector.broadcast %cst_34 : f32 to vector<8x32xf32>
    %61 = arith.addf %60, %59 : vector<8x32xf32>
    %62 = arith.divf %60, %61 : vector<8x32xf32>
    %63 = vector.extract_strided_slice %56 {offsets = [0, 32], sizes = [8, 32], strides = [1, 1]} : vector<8x128xf32> to vector<8x32xf32>
    %64 = arith.negf %63 : vector<8x32xf32>
    %65 = math.exp %64 : vector<8x32xf32>
    %cst_35 = arith.constant 1.000000e+00 : f32
    %66 = vector.broadcast %cst_35 : f32 to vector<8x32xf32>
    %67 = arith.addf %66, %65 : vector<8x32xf32>
    %68 = arith.divf %66, %67 : vector<8x32xf32>
    %69 = vector.extract_strided_slice %56 {offsets = [0, 64], sizes = [8, 32], strides = [1, 1]} : vector<8x128xf32> to vector<8x32xf32>
    %70 = math.tanh %69 : vector<8x32xf32>
    %71 = vector.extract_strided_slice %56 {offsets = [0, 96], sizes = [8, 32], strides = [1, 1]} : vector<8x128xf32> to vector<8x32xf32>
    %72 = arith.negf %71 : vector<8x32xf32>
    %73 = math.exp %72 : vector<8x32xf32>
    %cst_36 = arith.constant 1.000000e+00 : f32
    %74 = vector.broadcast %cst_36 : f32 to vector<8x32xf32>
    %75 = arith.addf %74, %73 : vector<8x32xf32>
    %76 = arith.divf %74, %75 : vector<8x32xf32>
    %c0_37 = arith.constant 0 : index
    %c0_38 = arith.constant 0 : index
    %77 = vector.load %arg9[%c0_37, %c0_38] : memref<8x32xf32, #tpu.memory_space<vmem>>, vector<8x32xf32>
    %78 = arith.mulf %68, %77 : vector<8x32xf32>
    %79 = arith.mulf %62, %70 : vector<8x32xf32>
    %80 = arith.addf %78, %79 : vector<8x32xf32>
    %81 = math.tanh %80 : vector<8x32xf32>
    %82 = arith.mulf %76, %81 : vector<8x32xf32>
    %c0_39 = arith.constant 0 : index
    %c0_40 = arith.constant 0 : index
    %83 = vector.load %arg9[%c0_39, %c0_40] : memref<8x32xf32, #tpu.memory_space<vmem>>, vector<8x32xf32>
    tpu.vector_store %arg9[%c0_39, %c0_40], %80 {strides = array<i32>} : memref<8x32xf32, #tpu.memory_space<vmem>>, vector<8x32xf32>,
    %c0_41 = arith.constant 0 : index
    %c0_42 = arith.constant 0 : index
    %84 = vector.load %arg8[%c0_41, %c0_42] : memref<8x32xf32, #tpu.memory_space<vmem>>, vector<8x32xf32>
    tpu.vector_store %arg8[%c0_41, %c0_42], %82 {strides = array<i32>} : memref<8x32xf32, #tpu.memory_space<vmem>>, vector<8x32xf32>,
    %85 = arith.index_cast %c1_i32 : i32 to index
    %c0_43 = arith.constant 0 : index
    %c0_44 = arith.constant 0 : index
    %86 = vector.load %arg11[%85, %c0_43, %c0_44] : memref<8x8x32xf32, #tpu.memory_space<vmem>>, vector<1x8x32xf32>
    %87 = vector.shape_cast %86 : vector<1x8x32xf32> to vector<8x32xf32>
    %88 = vector.shape_cast %82 : vector<8x32xf32> to vector<1x8x32xf32>
    tpu.vector_store %arg11[%85, %c0_43, %c0_44], %88 {strides = array<i32>} : memref<8x8x32xf32, #tpu.memory_space<vmem>>, vector<1x8x32xf32>,
    %c2_i32 = arith.constant 2 : i32
    %89 = arith.index_cast %c2_i32 : i32 to index
    %c0_45 = arith.constant 0 : index
    %c0_46 = arith.constant 0 : index
    %90 = vector.load %arg10[%89, %c0_45, %c0_46] : memref<8x8x128xf32, #tpu.memory_space<vmem>>, vector<1x8x128xf32>
    %91 = vector.shape_cast %90 : vector<1x8x128xf32> to vector<8x128xf32>
    %c0_47 = arith.constant 0 : index
    %c0_48 = arith.constant 0 : index
    %92 = vector.load %arg8[%c0_47, %c0_48] : memref<8x32xf32, #tpu.memory_space<vmem>>, vector<8x32xf32>
    %cst_49 = arith.constant dense<0.000000e+00> : vector<8x128xf32>
    %93 = tpu.matmul %92, %12, %cst_49 {dimension_numbers = #tpu.dot_dimension_numbers<[1], [0], [0], [1], [0, 0, 1, 1], [], []>} : vector<8x32xf32>, vector<32x128xf32>, vector<8x128xf32> -> vector<8x128xf32>
    %94 = arith.addf %91, %93 : vector<8x128xf32>
    %95 = vector.extract_strided_slice %94 {offsets = [0, 0], sizes = [8, 32], strides = [1, 1]} : vector<8x128xf32> to vector<8x32xf32>
    %96 = arith.negf %95 : vector<8x32xf32>
    %97 = math.exp %96 : vector<8x32xf32>
    %cst_50 = arith.constant 1.000000e+00 : f32
    %98 = vector.broadcast %cst_50 : f32 to vector<8x32xf32>
    %99 = arith.addf %98, %97 : vector<8x32xf32>
    %100 = arith.divf %98, %99 : vector<8x32xf32>
    %101 = vector.extract_strided_slice %94 {offsets = [0, 32], sizes = [8, 32], strides = [1, 1]} : vector<8x128xf32> to vector<8x32xf32>
    %102 = arith.negf %101 : vector<8x32xf32>
    %103 = math.exp %102 : vector<8x32xf32>
    %cst_51 = arith.constant 1.000000e+00 : f32
    %104 = vector.broadcast %cst_51 : f32 to vector<8x32xf32>
    %105 = arith.addf %104, %103 : vector<8x32xf32>
    %106 = arith.divf %104, %105 : vector<8x32xf32>
    %107 = vector.extract_strided_slice %94 {offsets = [0, 64], sizes = [8, 32], strides = [1, 1]} : vector<8x128xf32> to vector<8x32xf32>
    %108 = math.tanh %107 : vector<8x32xf32>
    %109 = vector.extract_strided_slice %94 {offsets = [0, 96], sizes = [8, 32], strides = [1, 1]} : vector<8x128xf32> to vector<8x32xf32>
    %110 = arith.negf %109 : vector<8x32xf32>
    %111 = math.exp %110 : vector<8x32xf32>
    %cst_52 = arith.constant 1.000000e+00 : f32
    %112 = vector.broadcast %cst_52 : f32 to vector<8x32xf32>
    %113 = arith.addf %112, %111 : vector<8x32xf32>
    %114 = arith.divf %112, %113 : vector<8x32xf32>
    %c0_53 = arith.constant 0 : index
    %c0_54 = arith.constant 0 : index
    %115 = vector.load %arg9[%c0_53, %c0_54] : memref<8x32xf32, #tpu.memory_space<vmem>>, vector<8x32xf32>
    %116 = arith.mulf %106, %115 : vector<8x32xf32>
    %117 = arith.mulf %100, %108 : vector<8x32xf32>
    %118 = arith.addf %116, %117 : vector<8x32xf32>
    %119 = math.tanh %118 : vector<8x32xf32>
    %120 = arith.mulf %114, %119 : vector<8x32xf32>
    %c0_55 = arith.constant 0 : index
    %c0_56 = arith.constant 0 : index
    %121 = vector.load %arg9[%c0_55, %c0_56] : memref<8x32xf32, #tpu.memory_space<vmem>>, vector<8x32xf32>
    tpu.vector_store %arg9[%c0_55, %c0_56], %118 {strides = array<i32>} : memref<8x32xf32, #tpu.memory_space<vmem>>, vector<8x32xf32>,
    %c0_57 = arith.constant 0 : index
    %c0_58 = arith.constant 0 : index
    %122 = vector.load %arg8[%c0_57, %c0_58] : memref<8x32xf32, #tpu.memory_space<vmem>>, vector<8x32xf32>
    tpu.vector_store %arg8[%c0_57, %c0_58], %120 {strides = array<i32>} : memref<8x32xf32, #tpu.memory_space<vmem>>, vector<8x32xf32>,
    %123 = arith.index_cast %c2_i32 : i32 to index
    %c0_59 = arith.constant 0 : index
    %c0_60 = arith.constant 0 : index
    %124 = vector.load %arg11[%123, %c0_59, %c0_60] : memref<8x8x32xf32, #tpu.memory_space<vmem>>, vector<1x8x32xf32>
    %125 = vector.shape_cast %124 : vector<1x8x32xf32> to vector<8x32xf32>
    %126 = vector.shape_cast %120 : vector<8x32xf32> to vector<1x8x32xf32>
    tpu.vector_store %arg11[%123, %c0_59, %c0_60], %126 {strides = array<i32>} : memref<8x8x32xf32, #tpu.memory_space<vmem>>, vector<1x8x32xf32>,
    %c3_i32 = arith.constant 3 : i32
    %127 = arith.index_cast %c3_i32 : i32 to index
    %c0_61 = arith.constant 0 : index
    %c0_62 = arith.constant 0 : index
    %128 = vector.load %arg10[%127, %c0_61, %c0_62] : memref<8x8x128xf32, #tpu.memory_space<vmem>>, vector<1x8x128xf32>
    %129 = vector.shape_cast %128 : vector<1x8x128xf32> to vector<8x128xf32>
    %c0_63 = arith.constant 0 : index
    %c0_64 = arith.constant 0 : index
    %130 = vector.load %arg8[%c0_63, %c0_64] : memref<8x32xf32, #tpu.memory_space<vmem>>, vector<8x32xf32>
    %cst_65 = arith.constant dense<0.000000e+00> : vector<8x128xf32>
    %131 = tpu.matmul %130, %12, %cst_65 {dimension_numbers = #tpu.dot_dimension_numbers<[1], [0], [0], [1], [0, 0, 1, 1], [], []>} : vector<8x32xf32>, vector<32x128xf32>, vector<8x128xf32> -> vector<8x128xf32>
    %132 = arith.addf %129, %131 : vector<8x128xf32>
    %133 = vector.extract_strided_slice %132 {offsets = [0, 0], sizes = [8, 32], strides = [1, 1]} : vector<8x128xf32> to vector<8x32xf32>
    %134 = arith.negf %133 : vector<8x32xf32>
    %135 = math.exp %134 : vector<8x32xf32>
    %cst_66 = arith.constant 1.000000e+00 : f32
    %136 = vector.broadcast %cst_66 : f32 to vector<8x32xf32>
    %137 = arith.addf %136, %135 : vector<8x32xf32>
    %138 = arith.divf %136, %137 : vector<8x32xf32>
    %139 = vector.extract_strided_slice %132 {offsets = [0, 32], sizes = [8, 32], strides = [1, 1]} : vector<8x128xf32> to vector<8x32xf32>
    %140 = arith.negf %139 : vector<8x32xf32>
    %141 = math.exp %140 : vector<8x32xf32>
    %cst_67 = arith.constant 1.000000e+00 : f32
    %142 = vector.broadcast %cst_67 : f32 to vector<8x32xf32>
    %143 = arith.addf %142, %141 : vector<8x32xf32>
    %144 = arith.divf %142, %143 : vector<8x32xf32>
    %145 = vector.extract_strided_slice %132 {offsets = [0, 64], sizes = [8, 32], strides = [1, 1]} : vector<8x128xf32> to vector<8x32xf32>
    %146 = math.tanh %145 : vector<8x32xf32>
    %147 = vector.extract_strided_slice %132 {offsets = [0, 96], sizes = [8, 32], strides = [1, 1]} : vector<8x128xf32> to vector<8x32xf32>
    %148 = arith.negf %147 : vector<8x32xf32>
    %149 = math.exp %148 : vector<8x32xf32>
    %cst_68 = arith.constant 1.000000e+00 : f32
    %150 = vector.broadcast %cst_68 : f32 to vector<8x32xf32>
    %151 = arith.addf %150, %149 : vector<8x32xf32>
    %152 = arith.divf %150, %151 : vector<8x32xf32>
    %c0_69 = arith.constant 0 : index
    %c0_70 = arith.constant 0 : index
    %153 = vector.load %arg9[%c0_69, %c0_70] : memref<8x32xf32, #tpu.memory_space<vmem>>, vector<8x32xf32>
    %154 = arith.mulf %144, %153 : vector<8x32xf32>
    %155 = arith.mulf %138, %146 : vector<8x32xf32>
    %156 = arith.addf %154, %155 : vector<8x32xf32>
    %157 = math.tanh %156 : vector<8x32xf32>
    %158 = arith.mulf %152, %157 : vector<8x32xf32>
    %c0_71 = arith.constant 0 : index
    %c0_72 = arith.constant 0 : index
    %159 = vector.load %arg9[%c0_71, %c0_72] : memref<8x32xf32, #tpu.memory_space<vmem>>, vector<8x32xf32>
    tpu.vector_store %arg9[%c0_71, %c0_72], %156 {strides = array<i32>} : memref<8x32xf32, #tpu.memory_space<vmem>>, vector<8x32xf32>,
    %c0_73 = arith.constant 0 : index
    %c0_74 = arith.constant 0 : index
    %160 = vector.load %arg8[%c0_73, %c0_74] : memref<8x32xf32, #tpu.memory_space<vmem>>, vector<8x32xf32>
    tpu.vector_store %arg8[%c0_73, %c0_74], %158 {strides = array<i32>} : memref<8x32xf32, #tpu.memory_space<vmem>>, vector<8x32xf32>,
    %161 = arith.index_cast %c3_i32 : i32 to index
    %c0_75 = arith.constant 0 : index
    %c0_76 = arith.constant 0 : index
    %162 = vector.load %arg11[%161, %c0_75, %c0_76] : memref<8x8x32xf32, #tpu.memory_space<vmem>>, vector<1x8x32xf32>
    %163 = vector.shape_cast %162 : vector<1x8x32xf32> to vector<8x32xf32>
    %164 = vector.shape_cast %158 : vector<8x32xf32> to vector<1x8x32xf32>
    tpu.vector_store %arg11[%161, %c0_75, %c0_76], %164 {strides = array<i32>} : memref<8x8x32xf32, #tpu.memory_space<vmem>>, vector<1x8x32xf32>,
    %c4_i32 = arith.constant 4 : i32
    %165 = arith.index_cast %c4_i32 : i32 to index
    %c0_77 = arith.constant 0 : index
    %c0_78 = arith.constant 0 : index
    %166 = vector.load %arg10[%165, %c0_77, %c0_78] : memref<8x8x128xf32, #tpu.memory_space<vmem>>, vector<1x8x128xf32>
    %167 = vector.shape_cast %166 : vector<1x8x128xf32> to vector<8x128xf32>
    %c0_79 = arith.constant 0 : index
    %c0_80 = arith.constant 0 : index
    %168 = vector.load %arg8[%c0_79, %c0_80] : memref<8x32xf32, #tpu.memory_space<vmem>>, vector<8x32xf32>
    %cst_81 = arith.constant dense<0.000000e+00> : vector<8x128xf32>
    %169 = tpu.matmul %168, %12, %cst_81 {dimension_numbers = #tpu.dot_dimension_numbers<[1], [0], [0], [1], [0, 0, 1, 1], [], []>} : vector<8x32xf32>, vector<32x128xf32>, vector<8x128xf32> -> vector<8x128xf32>
    %170 = arith.addf %167, %169 : vector<8x128xf32>
    %171 = vector.extract_strided_slice %170 {offsets = [0, 0], sizes = [8, 32], strides = [1, 1]} : vector<8x128xf32> to vector<8x32xf32>
    %172 = arith.negf %171 : vector<8x32xf32>
    %173 = math.exp %172 : vector<8x32xf32>
    %cst_82 = arith.constant 1.000000e+00 : f32
    %174 = vector.broadcast %cst_82 : f32 to vector<8x32xf32>
    %175 = arith.addf %174, %173 : vector<8x32xf32>
    %176 = arith.divf %174, %175 : vector<8x32xf32>
    %177 = vector.extract_strided_slice %170 {offsets = [0, 32], sizes = [8, 32], strides = [1, 1]} : vector<8x128xf32> to vector<8x32xf32>
    %178 = arith.negf %177 : vector<8x32xf32>
    %179 = math.exp %178 : vector<8x32xf32>
    %cst_83 = arith.constant 1.000000e+00 : f32
    %180 = vector.broadcast %cst_83 : f32 to vector<8x32xf32>
    %181 = arith.addf %180, %179 : vector<8x32xf32>
    %182 = arith.divf %180, %181 : vector<8x32xf32>
    %183 = vector.extract_strided_slice %170 {offsets = [0, 64], sizes = [8, 32], strides = [1, 1]} : vector<8x128xf32> to vector<8x32xf32>
    %184 = math.tanh %183 : vector<8x32xf32>
    %185 = vector.extract_strided_slice %170 {offsets = [0, 96], sizes = [8, 32], strides = [1, 1]} : vector<8x128xf32> to vector<8x32xf32>
    %186 = arith.negf %185 : vector<8x32xf32>
    %187 = math.exp %186 : vector<8x32xf32>
    %cst_84 = arith.constant 1.000000e+00 : f32
    %188 = vector.broadcast %cst_84 : f32 to vector<8x32xf32>
    %189 = arith.addf %188, %187 : vector<8x32xf32>
    %190 = arith.divf %188, %189 : vector<8x32xf32>
    %c0_85 = arith.constant 0 : index
    %c0_86 = arith.constant 0 : index
    %191 = vector.load %arg9[%c0_85, %c0_86] : memref<8x32xf32, #tpu.memory_space<vmem>>, vector<8x32xf32>
    %192 = arith.mulf %182, %191 : vector<8x32xf32>
    %193 = arith.mulf %176, %184 : vector<8x32xf32>
    %194 = arith.addf %192, %193 : vector<8x32xf32>
    %195 = math.tanh %194 : vector<8x32xf32>
    %196 = arith.mulf %190, %195 : vector<8x32xf32>
    %c0_87 = arith.constant 0 : index
    %c0_88 = arith.constant 0 : index
    %197 = vector.load %arg9[%c0_87, %c0_88] : memref<8x32xf32, #tpu.memory_space<vmem>>, vector<8x32xf32>
    tpu.vector_store %arg9[%c0_87, %c0_88], %194 {strides = array<i32>} : memref<8x32xf32, #tpu.memory_space<vmem>>, vector<8x32xf32>,
    %c0_89 = arith.constant 0 : index
    %c0_90 = arith.constant 0 : index
    %198 = vector.load %arg8[%c0_89, %c0_90] : memref<8x32xf32, #tpu.memory_space<vmem>>, vector<8x32xf32>
    tpu.vector_store %arg8[%c0_89, %c0_90], %196 {strides = array<i32>} : memref<8x32xf32, #tpu.memory_space<vmem>>, vector<8x32xf32>,
    %199 = arith.index_cast %c4_i32 : i32 to index
    %c0_91 = arith.constant 0 : index
    %c0_92 = arith.constant 0 : index
    %200 = vector.load %arg11[%199, %c0_91, %c0_92] : memref<8x8x32xf32, #tpu.memory_space<vmem>>, vector<1x8x32xf32>
    %201 = vector.shape_cast %200 : vector<1x8x32xf32> to vector<8x32xf32>
    %202 = vector.shape_cast %196 : vector<8x32xf32> to vector<1x8x32xf32>
    tpu.vector_store %arg11[%199, %c0_91, %c0_92], %202 {strides = array<i32>} : memref<8x8x32xf32, #tpu.memory_space<vmem>>, vector<1x8x32xf32>,
    %c5_i32 = arith.constant 5 : i32
    %203 = arith.index_cast %c5_i32 : i32 to index
    %c0_93 = arith.constant 0 : index
    %c0_94 = arith.constant 0 : index
    %204 = vector.load %arg10[%203, %c0_93, %c0_94] : memref<8x8x128xf32, #tpu.memory_space<vmem>>, vector<1x8x128xf32>
    %205 = vector.shape_cast %204 : vector<1x8x128xf32> to vector<8x128xf32>
    %c0_95 = arith.constant 0 : index
    %c0_96 = arith.constant 0 : index
    %206 = vector.load %arg8[%c0_95, %c0_96] : memref<8x32xf32, #tpu.memory_space<vmem>>, vector<8x32xf32>
    %cst_97 = arith.constant dense<0.000000e+00> : vector<8x128xf32>
    %207 = tpu.matmul %206, %12, %cst_97 {dimension_numbers = #tpu.dot_dimension_numbers<[1], [0], [0], [1], [0, 0, 1, 1], [], []>} : vector<8x32xf32>, vector<32x128xf32>, vector<8x128xf32> -> vector<8x128xf32>
    %208 = arith.addf %205, %207 : vector<8x128xf32>
    %209 = vector.extract_strided_slice %208 {offsets = [0, 0], sizes = [8, 32], strides = [1, 1]} : vector<8x128xf32> to vector<8x32xf32>
    %210 = arith.negf %209 : vector<8x32xf32>
    %211 = math.exp %210 : vector<8x32xf32>
    %cst_98 = arith.constant 1.000000e+00 : f32
    %212 = vector.broadcast %cst_98 : f32 to vector<8x32xf32>
    %213 = arith.addf %212, %211 : vector<8x32xf32>
    %214 = arith.divf %212, %213 : vector<8x32xf32>
    %215 = vector.extract_strided_slice %208 {offsets = [0, 32], sizes = [8, 32], strides = [1, 1]} : vector<8x128xf32> to vector<8x32xf32>
    %216 = arith.negf %215 : vector<8x32xf32>
    %217 = math.exp %216 : vector<8x32xf32>
    %cst_99 = arith.constant 1.000000e+00 : f32
    %218 = vector.broadcast %cst_99 : f32 to vector<8x32xf32>
    %219 = arith.addf %218, %217 : vector<8x32xf32>
    %220 = arith.divf %218, %219 : vector<8x32xf32>
    %221 = vector.extract_strided_slice %208 {offsets = [0, 64], sizes = [8, 32], strides = [1, 1]} : vector<8x128xf32> to vector<8x32xf32>
    %222 = math.tanh %221 : vector<8x32xf32>
    %223 = vector.extract_strided_slice %208 {offsets = [0, 96], sizes = [8, 32], strides = [1, 1]} : vector<8x128xf32> to vector<8x32xf32>
    %224 = arith.negf %223 : vector<8x32xf32>
    %225 = math.exp %224 : vector<8x32xf32>
    %cst_100 = arith.constant 1.000000e+00 : f32
    %226 = vector.broadcast %cst_100 : f32 to vector<8x32xf32>
    %227 = arith.addf %226, %225 : vector<8x32xf32>
    %228 = arith.divf %226, %227 : vector<8x32xf32>
    %c0_101 = arith.constant 0 : index
    %c0_102 = arith.constant 0 : index
    %229 = vector.load %arg9[%c0_101, %c0_102] : memref<8x32xf32, #tpu.memory_space<vmem>>, vector<8x32xf32>
    %230 = arith.mulf %220, %229 : vector<8x32xf32>
    %231 = arith.mulf %214, %222 : vector<8x32xf32>
    %232 = arith.addf %230, %231 : vector<8x32xf32>
    %233 = math.tanh %232 : vector<8x32xf32>
    %234 = arith.mulf %228, %233 : vector<8x32xf32>
    %c0_103 = arith.constant 0 : index
    %c0_104 = arith.constant 0 : index
    %235 = vector.load %arg9[%c0_103, %c0_104] : memref<8x32xf32, #tpu.memory_space<vmem>>, vector<8x32xf32>
    tpu.vector_store %arg9[%c0_103, %c0_104], %232 {strides = array<i32>} : memref<8x32xf32, #tpu.memory_space<vmem>>, vector<8x32xf32>,
    %c0_105 = arith.constant 0 : index
    %c0_106 = arith.constant 0 : index
    %236 = vector.load %arg8[%c0_105, %c0_106] : memref<8x32xf32, #tpu.memory_space<vmem>>, vector<8x32xf32>
    tpu.vector_store %arg8[%c0_105, %c0_106], %234 {strides = array<i32>} : memref<8x32xf32, #tpu.memory_space<vmem>>, vector<8x32xf32>,
    %237 = arith.index_cast %c5_i32 : i32 to index
    %c0_107 = arith.constant 0 : index
    %c0_108 = arith.constant 0 : index
    %238 = vector.load %arg11[%237, %c0_107, %c0_108] : memref<8x8x32xf32, #tpu.memory_space<vmem>>, vector<1x8x32xf32>
    %239 = vector.shape_cast %238 : vector<1x8x32xf32> to vector<8x32xf32>
    %240 = vector.shape_cast %234 : vector<8x32xf32> to vector<1x8x32xf32>
    tpu.vector_store %arg11[%237, %c0_107, %c0_108], %240 {strides = array<i32>} : memref<8x8x32xf32, #tpu.memory_space<vmem>>, vector<1x8x32xf32>,
    %c6_i32 = arith.constant 6 : i32
    %241 = arith.index_cast %c6_i32 : i32 to index
    %c0_109 = arith.constant 0 : index
    %c0_110 = arith.constant 0 : index
    %242 = vector.load %arg10[%241, %c0_109, %c0_110] : memref<8x8x128xf32, #tpu.memory_space<vmem>>, vector<1x8x128xf32>
    %243 = vector.shape_cast %242 : vector<1x8x128xf32> to vector<8x128xf32>
    %c0_111 = arith.constant 0 : index
    %c0_112 = arith.constant 0 : index
    %244 = vector.load %arg8[%c0_111, %c0_112] : memref<8x32xf32, #tpu.memory_space<vmem>>, vector<8x32xf32>
    %cst_113 = arith.constant dense<0.000000e+00> : vector<8x128xf32>
    %245 = tpu.matmul %244, %12, %cst_113 {dimension_numbers = #tpu.dot_dimension_numbers<[1], [0], [0], [1], [0, 0, 1, 1], [], []>} : vector<8x32xf32>, vector<32x128xf32>, vector<8x128xf32> -> vector<8x128xf32>
    %246 = arith.addf %243, %245 : vector<8x128xf32>
    %247 = vector.extract_strided_slice %246 {offsets = [0, 0], sizes = [8, 32], strides = [1, 1]} : vector<8x128xf32> to vector<8x32xf32>
    %248 = arith.negf %247 : vector<8x32xf32>
    %249 = math.exp %248 : vector<8x32xf32>
    %cst_114 = arith.constant 1.000000e+00 : f32
    %250 = vector.broadcast %cst_114 : f32 to vector<8x32xf32>
    %251 = arith.addf %250, %249 : vector<8x32xf32>
    %252 = arith.divf %250, %251 : vector<8x32xf32>
    %253 = vector.extract_strided_slice %246 {offsets = [0, 32], sizes = [8, 32], strides = [1, 1]} : vector<8x128xf32> to vector<8x32xf32>
    %254 = arith.negf %253 : vector<8x32xf32>
    %255 = math.exp %254 : vector<8x32xf32>
    %cst_115 = arith.constant 1.000000e+00 : f32
    %256 = vector.broadcast %cst_115 : f32 to vector<8x32xf32>
    %257 = arith.addf %256, %255 : vector<8x32xf32>
    %258 = arith.divf %256, %257 : vector<8x32xf32>
    %259 = vector.extract_strided_slice %246 {offsets = [0, 64], sizes = [8, 32], strides = [1, 1]} : vector<8x128xf32> to vector<8x32xf32>
    %260 = math.tanh %259 : vector<8x32xf32>
    %261 = vector.extract_strided_slice %246 {offsets = [0, 96], sizes = [8, 32], strides = [1, 1]} : vector<8x128xf32> to vector<8x32xf32>
    %262 = arith.negf %261 : vector<8x32xf32>
    %263 = math.exp %262 : vector<8x32xf32>
    %cst_116 = arith.constant 1.000000e+00 : f32
    %264 = vector.broadcast %cst_116 : f32 to vector<8x32xf32>
    %265 = arith.addf %264, %263 : vector<8x32xf32>
    %266 = arith.divf %264, %265 : vector<8x32xf32>
    %c0_117 = arith.constant 0 : index
    %c0_118 = arith.constant 0 : index
    %267 = vector.load %arg9[%c0_117, %c0_118] : memref<8x32xf32, #tpu.memory_space<vmem>>, vector<8x32xf32>
    %268 = arith.mulf %258, %267 : vector<8x32xf32>
    %269 = arith.mulf %252, %260 : vector<8x32xf32>
    %270 = arith.addf %268, %269 : vector<8x32xf32>
    %271 = math.tanh %270 : vector<8x32xf32>
    %272 = arith.mulf %266, %271 : vector<8x32xf32>
    %c0_119 = arith.constant 0 : index
    %c0_120 = arith.constant 0 : index
    %273 = vector.load %arg9[%c0_119, %c0_120] : memref<8x32xf32, #tpu.memory_space<vmem>>, vector<8x32xf32>
    tpu.vector_store %arg9[%c0_119, %c0_120], %270 {strides = array<i32>} : memref<8x32xf32, #tpu.memory_space<vmem>>, vector<8x32xf32>,
    %c0_121 = arith.constant 0 : index
    %c0_122 = arith.constant 0 : index
    %274 = vector.load %arg8[%c0_121, %c0_122] : memref<8x32xf32, #tpu.memory_space<vmem>>, vector<8x32xf32>
    tpu.vector_store %arg8[%c0_121, %c0_122], %272 {strides = array<i32>} : memref<8x32xf32, #tpu.memory_space<vmem>>, vector<8x32xf32>,
    %275 = arith.index_cast %c6_i32 : i32 to index
    %c0_123 = arith.constant 0 : index
    %c0_124 = arith.constant 0 : index
    %276 = vector.load %arg11[%275, %c0_123, %c0_124] : memref<8x8x32xf32, #tpu.memory_space<vmem>>, vector<1x8x32xf32>
    %277 = vector.shape_cast %276 : vector<1x8x32xf32> to vector<8x32xf32>
    %278 = vector.shape_cast %272 : vector<8x32xf32> to vector<1x8x32xf32>
    tpu.vector_store %arg11[%275, %c0_123, %c0_124], %278 {strides = array<i32>} : memref<8x8x32xf32, #tpu.memory_space<vmem>>, vector<1x8x32xf32>,
    %c7_i32 = arith.constant 7 : i32
    %279 = arith.index_cast %c7_i32 : i32 to index
    %c0_125 = arith.constant 0 : index
    %c0_126 = arith.constant 0 : index
    %280 = vector.load %arg10[%279, %c0_125, %c0_126] : memref<8x8x128xf32, #tpu.memory_space<vmem>>, vector<1x8x128xf32>
    %281 = vector.shape_cast %280 : vector<1x8x128xf32> to vector<8x128xf32>
    %c0_127 = arith.constant 0 : index
    %c0_128 = arith.constant 0 : index
    %282 = vector.load %arg8[%c0_127, %c0_128] : memref<8x32xf32, #tpu.memory_space<vmem>>, vector<8x32xf32>
    %cst_129 = arith.constant dense<0.000000e+00> : vector<8x128xf32>
    %283 = tpu.matmul %282, %12, %cst_129 {dimension_numbers = #tpu.dot_dimension_numbers<[1], [0], [0], [1], [0, 0, 1, 1], [], []>} : vector<8x32xf32>, vector<32x128xf32>, vector<8x128xf32> -> vector<8x128xf32>
    %284 = arith.addf %281, %283 : vector<8x128xf32>
    %285 = vector.extract_strided_slice %284 {offsets = [0, 0], sizes = [8, 32], strides = [1, 1]} : vector<8x128xf32> to vector<8x32xf32>
    %286 = arith.negf %285 : vector<8x32xf32>
    %287 = math.exp %286 : vector<8x32xf32>
    %cst_130 = arith.constant 1.000000e+00 : f32
    %288 = vector.broadcast %cst_130 : f32 to vector<8x32xf32>
    %289 = arith.addf %288, %287 : vector<8x32xf32>
    %290 = arith.divf %288, %289 : vector<8x32xf32>
    %291 = vector.extract_strided_slice %284 {offsets = [0, 32], sizes = [8, 32], strides = [1, 1]} : vector<8x128xf32> to vector<8x32xf32>
    %292 = arith.negf %291 : vector<8x32xf32>
    %293 = math.exp %292 : vector<8x32xf32>
    %cst_131 = arith.constant 1.000000e+00 : f32
    %294 = vector.broadcast %cst_131 : f32 to vector<8x32xf32>
    %295 = arith.addf %294, %293 : vector<8x32xf32>
    %296 = arith.divf %294, %295 : vector<8x32xf32>
    %297 = vector.extract_strided_slice %284 {offsets = [0, 64], sizes = [8, 32], strides = [1, 1]} : vector<8x128xf32> to vector<8x32xf32>
    %298 = math.tanh %297 : vector<8x32xf32>
    %299 = vector.extract_strided_slice %284 {offsets = [0, 96], sizes = [8, 32], strides = [1, 1]} : vector<8x128xf32> to vector<8x32xf32>
    %300 = arith.negf %299 : vector<8x32xf32>
    %301 = math.exp %300 : vector<8x32xf32>
    %cst_132 = arith.constant 1.000000e+00 : f32
    %302 = vector.broadcast %cst_132 : f32 to vector<8x32xf32>
    %303 = arith.addf %302, %301 : vector<8x32xf32>
    %304 = arith.divf %302, %303 : vector<8x32xf32>
    %c0_133 = arith.constant 0 : index
    %c0_134 = arith.constant 0 : index
    %305 = vector.load %arg9[%c0_133, %c0_134] : memref<8x32xf32, #tpu.memory_space<vmem>>, vector<8x32xf32>
    %306 = arith.mulf %296, %305 : vector<8x32xf32>
    %307 = arith.mulf %290, %298 : vector<8x32xf32>
    %308 = arith.addf %306, %307 : vector<8x32xf32>
    %309 = math.tanh %308 : vector<8x32xf32>
    %310 = arith.mulf %304, %309 : vector<8x32xf32>
    %c0_135 = arith.constant 0 : index
    %c0_136 = arith.constant 0 : index
    %311 = vector.load %arg9[%c0_135, %c0_136] : memref<8x32xf32, #tpu.memory_space<vmem>>, vector<8x32xf32>
    tpu.vector_store %arg9[%c0_135, %c0_136], %308 {strides = array<i32>} : memref<8x32xf32, #tpu.memory_space<vmem>>, vector<8x32xf32>,
    %c0_137 = arith.constant 0 : index
    %c0_138 = arith.constant 0 : index
    %312 = vector.load %arg8[%c0_137, %c0_138] : memref<8x32xf32, #tpu.memory_space<vmem>>, vector<8x32xf32>
    tpu.vector_store %arg8[%c0_137, %c0_138], %310 {strides = array<i32>} : memref<8x32xf32, #tpu.memory_space<vmem>>, vector<8x32xf32>,
    %313 = arith.index_cast %c7_i32 : i32 to index
    %c0_139 = arith.constant 0 : index
    %c0_140 = arith.constant 0 : index
    %314 = vector.load %arg11[%313, %c0_139, %c0_140] : memref<8x8x32xf32, #tpu.memory_space<vmem>>, vector<1x8x32xf32>
    %315 = vector.shape_cast %314 : vector<1x8x32xf32> to vector<8x32xf32>
    %316 = vector.shape_cast %310 : vector<8x32xf32> to vector<1x8x32xf32>
    tpu.vector_store %arg11[%313, %c0_139, %c0_140], %316 {strides = array<i32>} : memref<8x8x32xf32, #tpu.memory_space<vmem>>, vector<1x8x32xf32>,
    %c8_i32 = arith.constant 8 : i32
    %c0_141 = arith.constant 0 : index
    %c0_142 = arith.constant 0 : index
    %c0_143 = arith.constant 0 : index
    %317 = vector.load %arg11[%c0_141, %c0_142, %c0_143] : memref<8x8x32xf32, #tpu.memory_space<vmem>>, vector<8x8x32xf32>
    %318 = vector.shape_cast %317 : vector<8x8x32xf32> to vector<64x32xf32>
    %c0_144 = arith.constant 0 : index
    %c0_145 = arith.constant 0 : index
    %319 = vector.load %arg5[%c0_144, %c0_145] : memref<32x4xf32, #tpu.memory_space<vmem>>, vector<32x4xf32>
    %cst_146 = arith.constant dense<0.000000e+00> : vector<64x4xf32>
    %320 = tpu.matmul %318, %319, %cst_146 {dimension_numbers = #tpu.dot_dimension_numbers<[1], [0], [0], [1], [0, 0, 1, 1], [], []>} : vector<64x32xf32>, vector<32x4xf32>, vector<64x4xf32> -> vector<64x4xf32>
    %c0_147 = arith.constant 0 : index
    %c0_148 = arith.constant 0 : index
    %321 = vector.load %arg6[%c0_147, %c0_148] : memref<1x4xf32, #tpu.memory_space<vmem>>, vector<1x4xf32>
    %322 = vector.broadcast %321 : vector<1x4xf32> to vector<64x4xf32>
    %323 = arith.addf %320, %322 : vector<64x4xf32>
    %324 = arith.negf %323 : vector<64x4xf32>
    %325 = math.exp %324 : vector<64x4xf32>
    %cst_149 = arith.constant 1.000000e+00 : f32
    %326 = vector.broadcast %cst_149 : f32 to vector<64x4xf32>
    %327 = arith.addf %326, %325 : vector<64x4xf32>
    %328 = arith.divf %326, %327 : vector<64x4xf32>
    %329 = vector.shape_cast %328 : vector<64x4xf32> to vector<8x8x4xf32>
    %c0_150 = arith.constant 0 : index
    %c0_151 = arith.constant 0 : index
    %c0_152 = arith.constant 0 : index
    %330 = vector.load %arg7[%c0_150, %c0_151, %c0_152] : memref<8x8x4xf32, #tpu.memory_space<vmem>>, vector<8x8x4xf32>
    tpu.vector_store %arg7[%c0_150, %c0_151, %c0_152], %329 {strides = array<i32>} : memref<8x8x4xf32, #tpu.memory_space<vmem>>, vector<8x8x4xf32>,
    return
  }
  func.func @transform_0(%arg0: i32) -> (i32, i32, i32) {
    %c0_i32 = arith.constant 0 : i32
    %c0_i32_0 = arith.constant 0 : i32
    %c0_i32_1 = arith.constant 0 : i32
    return %arg0, %c0_i32, %c0_i32_0 : i32, i32, i32
  }
  func.func @transform_1(%arg0: i32) -> (i32, i32) {
    %c0_i32 = arith.constant 0 : i32
    %c0_i32_0 = arith.constant 0 : i32
    %c0_i32_1 = arith.constant 0 : i32
    return %c0_i32, %c0_i32_0 : i32, i32
  }
  func.func @transform_2(%arg0: i32) -> (i32, i32) {
    %c0_i32 = arith.constant 0 : i32
    %c0_i32_0 = arith.constant 0 : i32
    %c0_i32_1 = arith.constant 0 : i32
    return %c0_i32, %c0_i32_0 : i32, i32
  }
  func.func @transform_3(%arg0: i32) -> (i32, i32) {
    %c0_i32 = arith.constant 0 : i32
    %c0_i32_0 = arith.constant 0 : i32
    %c0_i32_1 = arith.constant 0 : i32
    return %c0_i32, %c0_i32_0 : i32, i32
  }
  func.func @transform_4(%arg0: i32) -> (i32, i32) {
    %c0_i32 = arith.constant 0 : i32
    %c0_i32_0 = arith.constant 0 : i32
    %c0_i32_1 = arith.constant 0 : i32
    return %c0_i32, %c0_i32_0 : i32, i32
  }
  func.func @transform_5(%arg0: i32) -> (i32, i32) {
    %c0_i32 = arith.constant 0 : i32
    %c0_i32_0 = arith.constant 0 : i32
    %c0_i32_1 = arith.constant 0 : i32
    return %c0_i32, %c0_i32_0 : i32, i32
  }
  func.func @transform_6(%arg0: i32) -> (i32, i32, i32) {
    %c0_i32 = arith.constant 0 : i32
    %c0_i32_0 = arith.constant 0 : i32
    %c0_i32_1 = arith.constant 0 : i32
    return %arg0, %c0_i32, %c0_i32_0 : i32, i32, i32
  }
}

</mosaic_0001>

<llo_original>
// kernel: combine_stack_forward.1
$region0: #{combine_stack_forward.1}
  #allocation0 [shape = 'u32[]', space=smem, size = 0x4, offset = 0x4, fixed_abs, tag = 'smem constant byte address 0x4 - core index']
  #allocation1 [shape = 'u32[144,128]{1,0:T(1,128)}', space=vmem, size = 0x12000, scoped, tag = 'internal scratch']
  #allocation2 [shape = 'f32[8,32]{1,0:T(8,128)}', space=vmem, size = 0x1000, scoped, tag = 'scratch operand']
  #allocation3 [shape = 'f32[8,32]{1,0:T(8,128)}', space=vmem, size = 0x1000, scoped, tag = 'scratch operand']
  #allocation4 [shape = 'f32[8,8,128]{2,1,0:T(8,128)}', space=vmem, size = 0x8000, scoped, tag = 'scratch operand']
  #allocation5 [shape = 'f32[8,8,32]{2,1,0:T(8,128)}', space=vmem, size = 0x8000, scoped, tag = 'scratch operand']
  %s0 = inlined_call_operand.vmem [shape: f32[8,8,8], index: 0, kind: input, shape index: {}]
  %s1 = inlined_call_operand.vmem [shape: f32[8,128], index: 1, kind: input, shape index: {}]
  %s2 = inlined_call_operand.vmem [shape: f32[32,128], index: 2, kind: input, shape index: {}]
  %s3 = inlined_call_operand.vmem [shape: f32[1,128], index: 3, kind: input, shape index: {}]
  %s4 = inlined_call_operand.vmem [shape: f32[32,4], index: 4, kind: input, shape index: {}]
  %s5 = inlined_call_operand.vmem [shape: f32[1,4], index: 5, kind: input, shape index: {}]
  %s6 = inlined_call_operand.vmem [shape: f32[8,8,4], index: 6, kind: output, shape index: {}]
  %s7 = sld [smem:[#allocation0]]
  $region38: #{combine_stack_forward.1} parent=0
    _
  %s9 = ssub.s32 1, %s7
  %s10 = scalar_select 0, %s9, %s7
  // Predicated region
  $region2: #{combine_stack_forward.1} parent=0 // pred_check
    _
  $region3: #{combine_stack_forward.1} parent=0 // pred_check_branch
    %12 = sbr.rel (0) target = $region5
  $region4: #{combine_stack_forward.1} parent=0 // pred_region
    _
  $region5: #{combine_stack_forward.1} parent=0 // pred_fallthru
    _
  // Predicated region
  $region6: #{combine_stack_forward.1} parent=0 // pred_check
    _
  $region7: #{combine_stack_forward.1} parent=0 // pred_check_branch
    %14 = sbr.rel (0) target = $region9
  $region8: #{combine_stack_forward.1} parent=0 // pred_region
    _
  $region9: #{combine_stack_forward.1} parent=0 // pred_fallthru
    _
  // Predicated region
  $region10: #{combine_stack_forward.1} parent=0 // pred_check
    _
  $region11: #{combine_stack_forward.1} parent=0 // pred_check_branch
    %16 = sbr.rel (0) target = $region13
  $region12: #{combine_stack_forward.1} parent=0 // pred_region
    _
  $region13: #{combine_stack_forward.1} parent=0 // pred_fallthru
    _
  // Predicated region
  $region14: #{combine_stack_forward.1} parent=0 // pred_check
    _
  $region15: #{combine_stack_forward.1} parent=0 // pred_check_branch
    %18 = sbr.rel (0) target = $region17
  $region16: #{combine_stack_forward.1} parent=0 // pred_region
    _
  $region17: #{combine_stack_forward.1} parent=0 // pred_fallthru
    _
  // Predicated region
  $region18: #{combine_stack_forward.1} parent=0 // pred_check
    _
  $region19: #{combine_stack_forward.1} parent=0 // pred_check_branch
    %20 = sbr.rel (0) target = $region21
  $region20: #{combine_stack_forward.1} parent=0 // pred_region
    _
  $region21: #{combine_stack_forward.1} parent=0 // pred_fallthru
    _
  // Predicated region
  $region22: #{combine_stack_forward.1} parent=0 // pred_check
    _
  $region23: #{combine_stack_forward.1} parent=0 // pred_check_branch
    %22 = sbr.rel (0) target = $region25
  $region24: #{combine_stack_forward.1} parent=0 // pred_region
    _
  $region25: #{combine_stack_forward.1} parent=0 // pred_fallthru
    _
  %p23 = scmp.eq.s32.totalorder 0, 0
  // Predicated region
  $region26: #{combine_stack_forward.1} parent=0 // pred_check
    %p24 = pneg %p23
  $region27: #{combine_stack_forward.1} parent=0 // pred_check_branch
    %26 = sbr.rel (%p24) target = $region29
  $region28: #{combine_stack_forward.1} parent=0 // pred_region
    %vm27 = vcmask 261120
    %28 = vst.msk [vmem:[#allocation2] sm:$0xff] %vm27, 0.0
    %29 = vst.msk [vmem:[#allocation3] sm:$0xff] %vm27, 0.0
  $region29: #{combine_stack_forward.1} parent=0 // pred_fallthru
    _
  %v30 = vld [vmem:[%s0] sm:$0xff]
  %v31 = vld [vmem:[%s0 + $0x8] sm:$0xff]
  %v32 = vld [vmem:[%s0 + $0x10] sm:$0xff]
  %v33 = vld [vmem:[%s0 + $0x18] sm:$0xff]
  %v34 = vld [vmem:[%s0 + $0x20] sm:$0xff]
  %v35 = vld [vmem:[%s0 + $0x28] sm:$0xff]
  %v36 = vld [vmem:[%s0 + $0x30] sm:$0xff]
  %v37 = vld [vmem:[%s0 + $0x38] sm:$0xff]
  %v38 = vld [vmem:[%s1] sm:$0xff]
  %v39 = vld [vmem:[%s3] sm:$0x1]
  %v41 = vlaneseq
  %v42 = vshrl.u32 %v41, 7
  %v43 = vsub.s32 0, %v42
  %v44 = vrot.slane %v39, %v43
  %vm46 = vcmask 64512
  %v48 = vsel %vm46, %v30, 0
  %v51 = vsel %vm46, %v31, 0
  %v54 = vsel %vm46, %v32, 0
  %v57 = vsel %vm46, %v33, 0
  %v60 = vsel %vm46, %v34, 0
  %v63 = vsel %vm46, %v35, 0
  %v66 = vsel %vm46, %v36, 0
  %v69 = vsel %vm46, %v37, 0
  %71 = vmatprep.subr.mxu0 0.0
  %72 = vmatpush1.msra.mxu0 0.0
  %73 = vmatprep.subr.mxu0 0.0
  %74 = vmatpush1.msra.mxu0 0.0
  %75 = vmatprep.subr.mxu0 0.0
  %76 = vmatpush1.msra.mxu0 0.0
  %77 = vmatprep.subr.mxu0 0.0
  %78 = vmatpush1.msra.mxu0 0.0
  %79 = vmatprep.subr.mxu0 0.0
  %80 = vmatpush1.msra.mxu0 0.0
  %81 = vmatprep.subr.mxu0 0.0
  %82 = vmatpush1.msra.mxu0 0.0
  %83 = vmatprep.subr.mxu0 0.0
  %84 = vmatpush1.msra.mxu0 0.0
  %85 = vmatprep.subr.mxu0 0.0
  %86 = vmatpush1.msra.mxu0 0.0
  %87 = vmatprep.subr.mxu0 0.0
  %88 = vmatpush1.msra.mxu0 0.0
  %89 = vmatprep.subr.mxu0 0.0
  %90 = vmatpush1.msra.mxu0 0.0
  %91 = vmatprep.subr.mxu0 0.0
  %92 = vmatpush1.msra.mxu0 0.0
  %93 = vmatprep.subr.mxu0 0.0
  %94 = vmatpush1.msra.mxu0 0.0
  %95 = vmatprep.subr.mxu0 0.0
  %96 = vmatpush1.msra.mxu0 0.0
  %97 = vmatprep.subr.mxu0 0.0
  %98 = vmatpush1.msra.mxu0 0.0
  %99 = vmatprep.subr.mxu0 0.0
  %100 = vmatpush1.msra.mxu0 0.0
  %101 = vmatprep.subr.mxu0 0.0
  %102 = vmatpush1.msra.mxu0 %v38
  %103 = vmatprep.subr.mxu0 0.0
  %104 = vmatpush2.msra.mxu0 0.0
  %105 = vmatprep.subr.mxu0 0.0
  %106 = vmatpush2.msra.mxu0 0.0
  %107 = vmatprep.subr.mxu0 0.0
  %108 = vmatpush2.msra.mxu0 0.0
  %109 = vmatprep.subr.mxu0 0.0
  %110 = vmatpush2.msra.mxu0 0.0
  %111 = vmatprep.subr.mxu0 0.0
  %112 = vmatpush2.msra.mxu0 0.0
  %113 = vmatprep.subr.mxu0 0.0
  %114 = vmatpush2.msra.mxu0 0.0
  %115 = vmatprep.subr.mxu0 0.0
  %116 = vmatpush2.msra.mxu0 0.0
  %117 = vmatprep.subr.mxu0 0.0
  %118 = vmatpush2.msra.mxu0 0.0
  %119 = vmatprep.subr.mxu0 0.0
  %120 = vmatpush2.msra.mxu0 0.0
  %121 = vmatprep.subr.mxu0 0.0
  %122 = vmatpush2.msra.mxu0 0.0
  %123 = vmatprep.subr.mxu0 0.0
  %124 = vmatpush2.msra.mxu0 0.0
  %125 = vmatprep.subr.mxu0 0.0
  %126 = vmatpush2.msra.mxu0 0.0
  %127 = vmatprep.subr.mxu0 0.0
  %128 = vmatpush2.msra.mxu0 0.0
  %129 = vmatprep.subr.mxu0 0.0
  %130 = vmatpush2.msra.mxu0 0.0
  %131 = vmatprep.subr.mxu0 0.0
  %132 = vmatpush2.msra.mxu0 0.0
  %133 = vmatprep.subr.mxu0 0.0
  %134 = vmatpush2.msra.mxu0 0.0
  %135 = vmatprep.mubr.f32.mxu0 0.0
  %136 = vmatmul.mubr.f32.gmra.mxu0 %v48
  %v137 = vpop.f32.mrf.mxu0
  %v138 = vadd.f32 %v44, %v137
  %v139 = vpop.f32.mrf.mxu0
  %140 = vmatprep.mubr.f32.mxu0 0.0
  %141 = vmatmul.mubr.f32.gmra.mxu0 %v51
  %v142 = vpop.f32.mrf.mxu0
  %v143 = vadd.f32 %v44, %v142
  %v144 = vpop.f32.mrf.mxu0
  %145 = vmatprep.mubr.f32.mxu0 0.0
  %146 = vmatmul.mubr.f32.gmra.mxu0 %v54
  %v147 = vpop.f32.mrf.mxu0
  %v148 = vadd.f32 %v44, %v147
  %v149 = vpop.f32.mrf.mxu0
  %150 = vmatprep.mubr.f32.mxu0 0.0
  %151 = vmatmul.mubr.f32.gmra.mxu0 %v57
  %v152 = vpop.f32.mrf.mxu0
  %v153 = vadd.f32 %v44, %v152
  %v154 = vpop.f32.mrf.mxu0
  %155 = vmatprep.mubr.f32.mxu0 0.0
  %156 = vmatmul.mubr.f32.gmra.mxu0 %v60
  %v157 = vpop.f32.mrf.mxu0
  %v158 = vadd.f32 %v44, %v157
  %v159 = vpop.f32.mrf.mxu0
  %160 = vmatprep.mubr.f32.mxu0 0.0
  %161 = vmatmul.mubr.f32.gmra.mxu0 %v63
  %v162 = vpop.f32.mrf.mxu0
  %v163 = vadd.f32 %v44, %v162
  %v164 = vpop.f32.mrf.mxu0
  %165 = vmatprep.mubr.f32.mxu0 0.0
  %166 = vmatmul.mubr.f32.gmra.mxu0 %v66
  %v167 = vpop.f32.mrf.mxu0
  %v168 = vadd.f32 %v44, %v167
  %v169 = vpop.f32.mrf.mxu0
  %170 = vmatprep.mubr.f32.mxu0 0.0
  %171 = vmatmul.mubr.f32.gmra.mxu0 %v69
  %v172 = vpop.f32.mrf.mxu0
  %v173 = vadd.f32 %v44, %v172
  %v174 = vpop.f32.mrf.mxu0
  %175 = vdwg.mxu0
  %176 = vst [vmem:[#allocation4] sm:$0xff] %v138
  %177 = vst [vmem:[#allocation4 + $0x8] sm:$0xff] %v143
  %178 = vst [vmem:[#allocation4 + $0x10] sm:$0xff] %v148
  %179 = vst [vmem:[#allocation4 + $0x18] sm:$0xff] %v153
  %180 = vst [vmem:[#allocation4 + $0x20] sm:$0xff] %v158
  %181 = vst [vmem:[#allocation4 + $0x28] sm:$0xff] %v163
  %182 = vst [vmem:[#allocation4 + $0x30] sm:$0xff] %v168
  %183 = vst [vmem:[#allocation4 + $0x38] sm:$0xff] %v173
  %v184 = vld [vmem:[%s2] sm:$0xff]
  %v185 = vld [vmem:[%s2 + $0x8] sm:$0xff]
  %v186 = vld [vmem:[%s2 + $0x10] sm:$0xff]
  %v187 = vld [vmem:[%s2 + $0x18] sm:$0xff]
  %v188 = vld [vmem:[#allocation4] sm:$0xff]
  %v189 = vld [vmem:[#allocation2] sm:$0xff]
  %vm190 = vcmask 261120
  %v192 = vsel %vm190, %v189, 0
  %194 = vmatprep.subr.mxu0 0.0
  %195 = vmatpush1.msra.mxu0 0.0
  %196 = vmatprep.subr.mxu0 0.0
  %197 = vmatpush1.msra.mxu0 0.0
  %198 = vmatprep.subr.mxu0 0.0
  %199 = vmatpush1.msra.mxu0 0.0
  %200 = vmatprep.subr.mxu0 0.0
  %201 = vmatpush1.msra.mxu0 0.0
  %202 = vmatprep.subr.mxu0 0.0
  %203 = vmatpush1.msra.mxu0 0.0
  %204 = vmatprep.subr.mxu0 0.0
  %205 = vmatpush1.msra.mxu0 0.0
  %206 = vmatprep.subr.mxu0 0.0
  %207 = vmatpush1.msra.mxu0 0.0
  %208 = vmatprep.subr.mxu0 0.0
  %209 = vmatpush1.msra.mxu0 0.0
  %210 = vmatprep.subr.mxu0 0.0
  %211 = vmatpush1.msra.mxu0 0.0
  %212 = vmatprep.subr.mxu0 0.0
  %213 = vmatpush1.msra.mxu0 0.0
  %214 = vmatprep.subr.mxu0 0.0
  %215 = vmatpush1.msra.mxu0 0.0
  %216 = vmatprep.subr.mxu0 0.0
  %217 = vmatpush1.msra.mxu0 0.0
  %218 = vmatprep.subr.mxu0 0.0
  %219 = vmatpush1.msra.mxu0 %v187
  %220 = vmatprep.subr.mxu0 0.0
  %221 = vmatpush1.msra.mxu0 %v186
  %222 = vmatprep.subr.mxu0 0.0
  %223 = vmatpush1.msra.mxu0 %v185
  %224 = vmatprep.subr.mxu0 0.0
  %225 = vmatpush1.msra.mxu0 %v184
  %226 = vmatprep.subr.mxu0 0.0
  %227 = vmatpush2.msra.mxu0 0.0
  %228 = vmatprep.subr.mxu0 0.0
  %229 = vmatpush2.msra.mxu0 0.0
  %230 = vmatprep.subr.mxu0 0.0
  %231 = vmatpush2.msra.mxu0 0.0
  %232 = vmatprep.subr.mxu0 0.0
  %233 = vmatpush2.msra.mxu0 0.0
  %234 = vmatprep.subr.mxu0 0.0
  %235 = vmatpush2.msra.mxu0 0.0
  %236 = vmatprep.subr.mxu0 0.0
  %237 = vmatpush2.msra.mxu0 0.0
  %238 = vmatprep.subr.mxu0 0.0
  %239 = vmatpush2.msra.mxu0 0.0
  %240 = vmatprep.subr.mxu0 0.0
  %241 = vmatpush2.msra.mxu0 0.0
  %242 = vmatprep.subr.mxu0 0.0
  %243 = vmatpush2.msra.mxu0 0.0
  %244 = vmatprep.subr.mxu0 0.0
  %245 = vmatpush2.msra.mxu0 0.0
  %246 = vmatprep.subr.mxu0 0.0
  %247 = vmatpush2.msra.mxu0 0.0
  %248 = vmatprep.subr.mxu0 0.0
  %249 = vmatpush2.msra.mxu0 0.0
  %250 = vmatprep.subr.mxu0 0.0
  %251 = vmatpush2.msra.mxu0 0.0
  %252 = vmatprep.subr.mxu0 0.0
  %253 = vmatpush2.msra.mxu0 0.0
  %254 = vmatprep.subr.mxu0 0.0
  %255 = vmatpush2.msra.mxu0 0.0
  %256 = vmatprep.subr.mxu0 0.0
  %257 = vmatpush2.msra.mxu0 0.0
  %258 = vmatprep.mubr.f32.mxu0 0.0
  %259 = vmatmul.mubr.f32.gmra.mxu0 %v192
  %v260 = vpop.f32.mrf.mxu0
  %v261 = vadd.f32 0.0, %v260
  %v262 = vpop.f32.mrf.mxu0
  %263 = vdwg.mxu0
  %v264 = vadd.f32 %v188, %v261
  %v265 = vxor.u32 %v264, 2147483648
  %v266 = vmul.f32 %v265, 1.442695
  %v267 = vpow.pop %v266
  %v268 = vadd.f32 %v267, 1.0
  %v269 = vrcp.pop %v268
  %v270 = vmul.f32 1.0, %v269
  %v271 = vtanh.pop %v264
  %v272 = vld [vmem:[#allocation3] sm:$0xff]
  %274 = vrot.lane.b32.xlu0 %v272, 32
  %v275 = vpop.permute.xlu0 %274
  %v277 = vmul.f32 %v270, %v275
  %279 = vrot.lane.b32.xlu0 %v271, 64
  %v280 = vpop.permute.xlu0 %279
  %v282 = vmul.f32 %v270, %v280
  %284 = vrot.lane.b32.xlu0 %v282, 32
  %v285 = vpop.permute.xlu0 %284
  %v287 = vadd.f32 %v277, %v285
  %v288 = vtanh.pop %v287
  %290 = vrot.lane.b32.xlu0 %v288, 64
  %v291 = vpop.permute.xlu0 %290
  %v293 = vmul.f32 %v270, %v291
  %295 = vrot.lane.b32.xlu0 %v287, 96
  %v296 = vpop.permute.xlu0 %295
  %298 = vst.msk [vmem:[#allocation3] sm:$0xff] %vm190, %v296
  %300 = vrot.lane.b32.xlu0 %v293, 32
  %v301 = vpop.permute.xlu0 %300
  %303 = vst.msk [vmem:[#allocation2] sm:$0xff] %vm190, %v301
  %304 = vst.msk [vmem:[#allocation5] sm:$0xff] %vm190, %v301
  %s305 = scalar_lea.vmem [#allocation4], 8
  %v306 = vld [vmem:[%s305] sm:$0xff]
  %v307 = vld [vmem:[#allocation2] sm:$0xff]
  %v309 = vsel %vm190, %v307, 0
  %311 = vmatprep.subr.mxu0 0.0
  %312 = vmatpush1.msra.mxu0 0.0
  %313 = vmatprep.subr.mxu0 0.0
  %314 = vmatpush1.msra.mxu0 0.0
  %315 = vmatprep.subr.mxu0 0.0
  %316 = vmatpush1.msra.mxu0 0.0
  %317 = vmatprep.subr.mxu0 0.0
  %318 = vmatpush1.msra.mxu0 0.0
  %319 = vmatprep.subr.mxu0 0.0
  %320 = vmatpush1.msra.mxu0 0.0
  %321 = vmatprep.subr.mxu0 0.0
  %322 = vmatpush1.msra.mxu0 0.0
  %323 = vmatprep.subr.mxu0 0.0
  %324 = vmatpush1.msra.mxu0 0.0
  %325 = vmatprep.subr.mxu0 0.0
  %326 = vmatpush1.msra.mxu0 0.0
  %327 = vmatprep.subr.mxu0 0.0
  %328 = vmatpush1.msra.mxu0 0.0
  %329 = vmatprep.subr.mxu0 0.0
  %330 = vmatpush1.msra.mxu0 0.0
  %331 = vmatprep.subr.mxu0 0.0
  %332 = vmatpush1.msra.mxu0 0.0
  %333 = vmatprep.subr.mxu0 0.0
  %334 = vmatpush1.msra.mxu0 0.0
  %335 = vmatprep.subr.mxu0 0.0
  %336 = vmatpush1.msra.mxu0 %v187
  %337 = vmatprep.subr.mxu0 0.0
  %338 = vmatpush1.msra.mxu0 %v186
  %339 = vmatprep.subr.mxu0 0.0
  %340 = vmatpush1.msra.mxu0 %v185
  %341 = vmatprep.subr.mxu0 0.0
  %342 = vmatpush1.msra.mxu0 %v184
  %343 = vmatprep.subr.mxu0 0.0
  %344 = vmatpush2.msra.mxu0 0.0
  %345 = vmatprep.subr.mxu0 0.0
  %346 = vmatpush2.msra.mxu0 0.0
  %347 = vmatprep.subr.mxu0 0.0
  %348 = vmatpush2.msra.mxu0 0.0
  %349 = vmatprep.subr.mxu0 0.0
  %350 = vmatpush2.msra.mxu0 0.0
  %351 = vmatprep.subr.mxu0 0.0
  %352 = vmatpush2.msra.mxu0 0.0
  %353 = vmatprep.subr.mxu0 0.0
  %354 = vmatpush2.msra.mxu0 0.0
  %355 = vmatprep.subr.mxu0 0.0
  %356 = vmatpush2.msra.mxu0 0.0
  %357 = vmatprep.subr.mxu0 0.0
  %358 = vmatpush2.msra.mxu0 0.0
  %359 = vmatprep.subr.mxu0 0.0
  %360 = vmatpush2.msra.mxu0 0.0
  %361 = vmatprep.subr.mxu0 0.0
  %362 = vmatpush2.msra.mxu0 0.0
  %363 = vmatprep.subr.mxu0 0.0
  %364 = vmatpush2.msra.mxu0 0.0
  %365 = vmatprep.subr.mxu0 0.0
  %366 = vmatpush2.msra.mxu0 0.0
  %367 = vmatprep.subr.mxu0 0.0
  %368 = vmatpush2.msra.mxu0 0.0
  %369 = vmatprep.subr.mxu0 0.0
  %370 = vmatpush2.msra.mxu0 0.0
  %371 = vmatprep.subr.mxu0 0.0
  %372 = vmatpush2.msra.mxu0 0.0
  %373 = vmatprep.subr.mxu0 0.0
  %374 = vmatpush2.msra.mxu0 0.0
  %375 = vmatprep.mubr.f32.mxu0 0.0
  %376 = vmatmul.mubr.f32.gmra.mxu0 %v309
  %v377 = vpop.f32.mrf.mxu0
  %v378 = vadd.f32 0.0, %v377
  %v379 = vpop.f32.mrf.mxu0
  %380 = vdwg.mxu0
  %v381 = vadd.f32 %v306, %v378
  %v382 = vxor.u32 %v381, 2147483648
  %v383 = vmul.f32 %v382, 1.442695
  %v384 = vpow.pop %v383
  %v385 = vadd.f32 %v384, 1.0
  %v386 = vrcp.pop %v385
  %v387 = vmul.f32 1.0, %v386
  %v388 = vtanh.pop %v381
  %v389 = vld [vmem:[#allocation3] sm:$0xff]
  %391 = vrot.lane.b32.xlu0 %v389, 32
  %v392 = vpop.permute.xlu0 %391
  %v394 = vmul.f32 %v387, %v392
  %396 = vrot.lane.b32.xlu0 %v388, 64
  %v397 = vpop.permute.xlu0 %396
  %v399 = vmul.f32 %v387, %v397
  %401 = vrot.lane.b32.xlu0 %v399, 32
  %v402 = vpop.permute.xlu0 %401
  %v404 = vadd.f32 %v394, %v402
  %v405 = vtanh.pop %v404
  %407 = vrot.lane.b32.xlu0 %v405, 64
  %v408 = vpop.permute.xlu0 %407
  %v410 = vmul.f32 %v387, %v408
  %412 = vrot.lane.b32.xlu0 %v404, 96
  %v413 = vpop.permute.xlu0 %412
  %415 = vst.msk [vmem:[#allocation3] sm:$0xff] %vm190, %v413
  %417 = vrot.lane.b32.xlu0 %v410, 32
  %v418 = vpop.permute.xlu0 %417
  %420 = vst.msk [vmem:[#allocation2] sm:$0xff] %vm190, %v418
  %s421 = scalar_lea.vmem [#allocation5], 8
  %422 = vst.msk [vmem:[%s421] sm:$0xff] %vm190, %v418
  %s423 = scalar_lea.vmem [#allocation4], 16
  %v424 = vld [vmem:[%s423] sm:$0xff]
  %v425 = vld [vmem:[#allocation2] sm:$0xff]
  %v427 = vsel %vm190, %v425, 0
  %429 = vmatprep.subr.mxu0 0.0
  %430 = vmatpush1.msra.mxu0 0.0
  %431 = vmatprep.subr.mxu0 0.0
  %432 = vmatpush1.msra.mxu0 0.0
  %433 = vmatprep.subr.mxu0 0.0
  %434 = vmatpush1.msra.mxu0 0.0
  %435 = vmatprep.subr.mxu0 0.0
  %436 = vmatpush1.msra.mxu0 0.0
  %437 = vmatprep.subr.mxu0 0.0
  %438 = vmatpush1.msra.mxu0 0.0
  %439 = vmatprep.subr.mxu0 0.0
  %440 = vmatpush1.msra.mxu0 0.0
  %441 = vmatprep.subr.mxu0 0.0
  %442 = vmatpush1.msra.mxu0 0.0
  %443 = vmatprep.subr.mxu0 0.0
  %444 = vmatpush1.msra.mxu0 0.0
  %445 = vmatprep.subr.mxu0 0.0
  %446 = vmatpush1.msra.mxu0 0.0
  %447 = vmatprep.subr.mxu0 0.0
  %448 = vmatpush1.msra.mxu0 0.0
  %449 = vmatprep.subr.mxu0 0.0
  %450 = vmatpush1.msra.mxu0 0.0
  %451 = vmatprep.subr.mxu0 0.0
  %452 = vmatpush1.msra.mxu0 0.0
  %453 = vmatprep.subr.mxu0 0.0
  %454 = vmatpush1.msra.mxu0 %v187
  %455 = vmatprep.subr.mxu0 0.0
  %456 = vmatpush1.msra.mxu0 %v186
  %457 = vmatprep.subr.mxu0 0.0
  %458 = vmatpush1.msra.mxu0 %v185
  %459 = vmatprep.subr.mxu0 0.0
  %460 = vmatpush1.msra.mxu0 %v184
  %461 = vmatprep.subr.mxu0 0.0
  %462 = vmatpush2.msra.mxu0 0.0
  %463 = vmatprep.subr.mxu0 0.0
  %464 = vmatpush2.msra.mxu0 0.0
  %465 = vmatprep.subr.mxu0 0.0
  %466 = vmatpush2.msra.mxu0 0.0
  %467 = vmatprep.subr.mxu0 0.0
  %468 = vmatpush2.msra.mxu0 0.0
  %469 = vmatprep.subr.mxu0 0.0
  %470 = vmatpush2.msra.mxu0 0.0
  %471 = vmatprep.subr.mxu0 0.0
  %472 = vmatpush2.msra.mxu0 0.0
  %473 = vmatprep.subr.mxu0 0.0
  %474 = vmatpush2.msra.mxu0 0.0
  %475 = vmatprep.subr.mxu0 0.0
  %476 = vmatpush2.msra.mxu0 0.0
  %477 = vmatprep.subr.mxu0 0.0
  %478 = vmatpush2.msra.mxu0 0.0
  %479 = vmatprep.subr.mxu0 0.0
  %480 = vmatpush2.msra.mxu0 0.0
  %481 = vmatprep.subr.mxu0 0.0
  %482 = vmatpush2.msra.mxu0 0.0
  %483 = vmatprep.subr.mxu0 0.0
  %484 = vmatpush2.msra.mxu0 0.0
  %485 = vmatprep.subr.mxu0 0.0
  %486 = vmatpush2.msra.mxu0 0.0
  %487 = vmatprep.subr.mxu0 0.0
  %488 = vmatpush2.msra.mxu0 0.0
  %489 = vmatprep.subr.mxu0 0.0
  %490 = vmatpush2.msra.mxu0 0.0
  %491 = vmatprep.subr.mxu0 0.0
  %492 = vmatpush2.msra.mxu0 0.0
  %493 = vmatprep.mubr.f32.mxu0 0.0
  %494 = vmatmul.mubr.f32.gmra.mxu0 %v427
  %v495 = vpop.f32.mrf.mxu0
  %v496 = vadd.f32 0.0, %v495
  %v497 = vpop.f32.mrf.mxu0
  %498 = vdwg.mxu0
  %v499 = vadd.f32 %v424, %v496
  %v500 = vxor.u32 %v499, 2147483648
  %v501 = vmul.f32 %v500, 1.442695
  %v502 = vpow.pop %v501
  %v503 = vadd.f32 %v502, 1.0
  %v504 = vrcp.pop %v503
  %v505 = vmul.f32 1.0, %v504
  %v506 = vtanh.pop %v499
  %v507 = vld [vmem:[#allocation3] sm:$0xff]
  %509 = vrot.lane.b32.xlu0 %v507, 32
  %v510 = vpop.permute.xlu0 %509
  %v512 = vmul.f32 %v505, %v510
  %514 = vrot.lane.b32.xlu0 %v506, 64
  %v515 = vpop.permute.xlu0 %514
  %v517 = vmul.f32 %v505, %v515
  %519 = vrot.lane.b32.xlu0 %v517, 32
  %v520 = vpop.permute.xlu0 %519
  %v522 = vadd.f32 %v512, %v520
  %v523 = vtanh.pop %v522
  %525 = vrot.lane.b32.xlu0 %v523, 64
  %v526 = vpop.permute.xlu0 %525
  %v528 = vmul.f32 %v505, %v526
  %530 = vrot.lane.b32.xlu0 %v522, 96
  %v531 = vpop.permute.xlu0 %530
  %533 = vst.msk [vmem:[#allocation3] sm:$0xff] %vm190, %v531
  %535 = vrot.lane.b32.xlu0 %v528, 32
  %v536 = vpop.permute.xlu0 %535
  %538 = vst.msk [vmem:[#allocation2] sm:$0xff] %vm190, %v536
  %s539 = scalar_lea.vmem [#allocation5], 16
  %540 = vst.msk [vmem:[%s539] sm:$0xff] %vm190, %v536
  %s541 = scalar_lea.vmem [#allocation4], 24
  %v542 = vld [vmem:[%s541] sm:$0xff]
  %v543 = vld [vmem:[#allocation2] sm:$0xff]
  %v545 = vsel %vm190, %v543, 0
  %547 = vmatprep.subr.mxu0 0.0
  %548 = vmatpush1.msra.mxu0 0.0
  %549 = vmatprep.subr.mxu0 0.0
  %550 = vmatpush1.msra.mxu0 0.0
  %551 = vmatprep.subr.mxu0 0.0
  %552 = vmatpush1.msra.mxu0 0.0
  %553 = vmatprep.subr.mxu0 0.0
  %554 = vmatpush1.msra.mxu0 0.0
  %555 = vmatprep.subr.mxu0 0.0
  %556 = vmatpush1.msra.mxu0 0.0
  %557 = vmatprep.subr.mxu0 0.0
  %558 = vmatpush1.msra.mxu0 0.0
  %559 = vmatprep.subr.mxu0 0.0
  %560 = vmatpush1.msra.mxu0 0.0
  %561 = vmatprep.subr.mxu0 0.0
  %562 = vmatpush1.msra.mxu0 0.0
  %563 = vmatprep.subr.mxu0 0.0
  %564 = vmatpush1.msra.mxu0 0.0
  %565 = vmatprep.subr.mxu0 0.0
  %566 = vmatpush1.msra.mxu0 0.0
  %567 = vmatprep.subr.mxu0 0.0
  %568 = vmatpush1.msra.mxu0 0.0
  %569 = vmatprep.subr.mxu0 0.0
  %570 = vmatpush1.msra.mxu0 0.0
  %571 = vmatprep.subr.mxu0 0.0
  %572 = vmatpush1.msra.mxu0 %v187
  %573 = vmatprep.subr.mxu0 0.0
  %574 = vmatpush1.msra.mxu0 %v186
  %575 = vmatprep.subr.mxu0 0.0
  %576 = vmatpush1.msra.mxu0 %v185
  %577 = vmatprep.subr.mxu0 0.0
  %578 = vmatpush1.msra.mxu0 %v184
  %579 = vmatprep.subr.mxu0 0.0
  %580 = vmatpush2.msra.mxu0 0.0
  %581 = vmatprep.subr.mxu0 0.0
  %582 = vmatpush2.msra.mxu0 0.0
  %583 = vmatprep.subr.mxu0 0.0
  %584 = vmatpush2.msra.mxu0 0.0
  %585 = vmatprep.subr.mxu0 0.0
  %586 = vmatpush2.msra.mxu0 0.0
  %587 = vmatprep.subr.mxu0 0.0
  %588 = vmatpush2.msra.mxu0 0.0
  %589 = vmatprep.subr.mxu0 0.0
  %590 = vmatpush2.msra.mxu0 0.0
  %591 = vmatprep.subr.mxu0 0.0
  %592 = vmatpush2.msra.mxu0 0.0
  %593 = vmatprep.subr.mxu0 0.0
  %594 = vmatpush2.msra.mxu0 0.0
  %595 = vmatprep.subr.mxu0 0.0
  %596 = vmatpush2.msra.mxu0 0.0
  %597 = vmatprep.subr.mxu0 0.0
  %598 = vmatpush2.msra.mxu0 0.0
  %599 = vmatprep.subr.mxu0 0.0
  %600 = vmatpush2.msra.mxu0 0.0
  %601 = vmatprep.subr.mxu0 0.0
  %602 = vmatpush2.msra.mxu0 0.0
  %603 = vmatprep.subr.mxu0 0.0
  %604 = vmatpush2.msra.mxu0 0.0
  %605 = vmatprep.subr.mxu0 0.0
  %606 = vmatpush2.msra.mxu0 0.0
  %607 = vmatprep.subr.mxu0 0.0
  %608 = vmatpush2.msra.mxu0 0.0
  %609 = vmatprep.subr.mxu0 0.0
  %610 = vmatpush2.msra.mxu0 0.0
  %611 = vmatprep.mubr.f32.mxu0 0.0
  %612 = vmatmul.mubr.f32.gmra.mxu0 %v545
  %v613 = vpop.f32.mrf.mxu0
  %v614 = vadd.f32 0.0, %v613
  %v615 = vpop.f32.mrf.mxu0
  %616 = vdwg.mxu0
  %v617 = vadd.f32 %v542, %v614
  %v618 = vxor.u32 %v617, 2147483648
  %v619 = vmul.f32 %v618, 1.442695
  %v620 = vpow.pop %v619
  %v621 = vadd.f32 %v620, 1.0
  %v622 = vrcp.pop %v621
  %v623 = vmul.f32 1.0, %v622
  %v624 = vtanh.pop %v617
  %v625 = vld [vmem:[#allocation3] sm:$0xff]
  %627 = vrot.lane.b32.xlu0 %v625, 32
  %v628 = vpop.permute.xlu0 %627
  %v630 = vmul.f32 %v623, %v628
  %632 = vrot.lane.b32.xlu0 %v624, 64
  %v633 = vpop.permute.xlu0 %632
  %v635 = vmul.f32 %v623, %v633
  %637 = vrot.lane.b32.xlu0 %v635, 32
  %v638 = vpop.permute.xlu0 %637
  %v640 = vadd.f32 %v630, %v638
  %v641 = vtanh.pop %v640
  %643 = vrot.lane.b32.xlu0 %v641, 64
  %v644 = vpop.permute.xlu0 %643
  %v646 = vmul.f32 %v623, %v644
  %648 = vrot.lane.b32.xlu0 %v640, 96
  %v649 = vpop.permute.xlu0 %648
  %651 = vst.msk [vmem:[#allocation3] sm:$0xff] %vm190, %v649
  %653 = vrot.lane.b32.xlu0 %v646, 32
  %v654 = vpop.permute.xlu0 %653
  %656 = vst.msk [vmem:[#allocation2] sm:$0xff] %vm190, %v654
  %s657 = scalar_lea.vmem [#allocation5], 24
  %658 = vst.msk [vmem:[%s657] sm:$0xff] %vm190, %v654
  %s659 = scalar_lea.vmem [#allocation4], 32
  %v660 = vld [vmem:[%s659] sm:$0xff]
  %v661 = vld [vmem:[#allocation2] sm:$0xff]
  %v663 = vsel %vm190, %v661, 0
  %665 = vmatprep.subr.mxu0 0.0
  %666 = vmatpush1.msra.mxu0 0.0
  %667 = vmatprep.subr.mxu0 0.0
  %668 = vmatpush1.msra.mxu0 0.0
  %669 = vmatprep.subr.mxu0 0.0
  %670 = vmatpush1.msra.mxu0 0.0
  %671 = vmatprep.subr.mxu0 0.0
  %672 = vmatpush1.msra.mxu0 0.0
  %673 = vmatprep.subr.mxu0 0.0
  %674 = vmatpush1.msra.mxu0 0.0
  %675 = vmatprep.subr.mxu0 0.0
  %676 = vmatpush1.msra.mxu0 0.0
  %677 = vmatprep.subr.mxu0 0.0
  %678 = vmatpush1.msra.mxu0 0.0
  %679 = vmatprep.subr.mxu0 0.0
  %680 = vmatpush1.msra.mxu0 0.0
  %681 = vmatprep.subr.mxu0 0.0
  %682 = vmatpush1.msra.mxu0 0.0
  %683 = vmatprep.subr.mxu0 0.0
  %684 = vmatpush1.msra.mxu0 0.0
  %685 = vmatprep.subr.mxu0 0.0
  %686 = vmatpush1.msra.mxu0 0.0
  %687 = vmatprep.subr.mxu0 0.0
  %688 = vmatpush1.msra.mxu0 0.0
  %689 = vmatprep.subr.mxu0 0.0
  %690 = vmatpush1.msra.mxu0 %v187
  %691 = vmatprep.subr.mxu0 0.0
  %692 = vmatpush1.msra.mxu0 %v186
  %693 = vmatprep.subr.mxu0 0.0
  %694 = vmatpush1.msra.mxu0 %v185
  %695 = vmatprep.subr.mxu0 0.0
  %696 = vmatpush1.msra.mxu0 %v184
  %697 = vmatprep.subr.mxu0 0.0
  %698 = vmatpush2.msra.mxu0 0.0
  %699 = vmatprep.subr.mxu0 0.0
  %700 = vmatpush2.msra.mxu0 0.0
  %701 = vmatprep.subr.mxu0 0.0
  %702 = vmatpush2.msra.mxu0 0.0
  %703 = vmatprep.subr.mxu0 0.0
  %704 = vmatpush2.msra.mxu0 0.0
  %705 = vmatprep.subr.mxu0 0.0
  %706 = vmatpush2.msra.mxu0 0.0
  %707 = vmatprep.subr.mxu0 0.0
  %708 = vmatpush2.msra.mxu0 0.0
  %709 = vmatprep.subr.mxu0 0.0
  %710 = vmatpush2.msra.mxu0 0.0
  %711 = vmatprep.subr.mxu0 0.0
  %712 = vmatpush2.msra.mxu0 0.0
  %713 = vmatprep.subr.mxu0 0.0
  %714 = vmatpush2.msra.mxu0 0.0
  %715 = vmatprep.subr.mxu0 0.0
  %716 = vmatpush2.msra.mxu0 0.0
  %717 = vmatprep.subr.mxu0 0.0
  %718 = vmatpush2.msra.mxu0 0.0
  %719 = vmatprep.subr.mxu0 0.0
  %720 = vmatpush2.msra.mxu0 0.0
  %721 = vmatprep.subr.mxu0 0.0
  %722 = vmatpush2.msra.mxu0 0.0
  %723 = vmatprep.subr.mxu0 0.0
  %724 = vmatpush2.msra.mxu0 0.0
  %725 = vmatprep.subr.mxu0 0.0
  %726 = vmatpush2.msra.mxu0 0.0
  %727 = vmatprep.subr.mxu0 0.0
  %728 = vmatpush2.msra.mxu0 0.0
  %729 = vmatprep.mubr.f32.mxu0 0.0
  %730 = vmatmul.mubr.f32.gmra.mxu0 %v663
  %v731 = vpop.f32.mrf.mxu0
  %v732 = vadd.f32 0.0, %v731
  %v733 = vpop.f32.mrf.mxu0
  %734 = vdwg.mxu0
  %v735 = vadd.f32 %v660, %v732
  %v736 = vxor.u32 %v735, 2147483648
  %v737 = vmul.f32 %v736, 1.442695
  %v738 = vpow.pop %v737
  %v739 = vadd.f32 %v738, 1.0
  %v740 = vrcp.pop %v739
  %v741 = vmul.f32 1.0, %v740
  %v742 = vtanh.pop %v735
  %v743 = vld [vmem:[#allocation3] sm:$0xff]
  %745 = vrot.lane.b32.xlu0 %v743, 32
  %v746 = vpop.permute.xlu0 %745
  %v748 = vmul.f32 %v741, %v746
  %750 = vrot.lane.b32.xlu0 %v742, 64
  %v751 = vpop.permute.xlu0 %750
  %v753 = vmul.f32 %v741, %v751
  %755 = vrot.lane.b32.xlu0 %v753, 32
  %v756 = vpop.permute.xlu0 %755
  %v758 = vadd.f32 %v748, %v756
  %v759 = vtanh.pop %v758
  %761 = vrot.lane.b32.xlu0 %v759, 64
  %v762 = vpop.permute.xlu0 %761
  %v764 = vmul.f32 %v741, %v762
  %766 = vrot.lane.b32.xlu0 %v758, 96
  %v767 = vpop.permute.xlu0 %766
  %769 = vst.msk [vmem:[#allocation3] sm:$0xff] %vm190, %v767
  %771 = vrot.lane.b32.xlu0 %v764, 32
  %v772 = vpop.permute.xlu0 %771
  %774 = vst.msk [vmem:[#allocation2] sm:$0xff] %vm190, %v772
  %s775 = scalar_lea.vmem [#allocation5], 32
  %776 = vst.msk [vmem:[%s775] sm:$0xff] %vm190, %v772
  %s777 = scalar_lea.vmem [#allocation4], 40
  %v778 = vld [vmem:[%s777] sm:$0xff]
  %v779 = vld [vmem:[#allocation2] sm:$0xff]
  %v781 = vsel %vm190, %v779, 0
  %783 = vmatprep.subr.mxu0 0.0
  %784 = vmatpush1.msra.mxu0 0.0
  %785 = vmatprep.subr.mxu0 0.0
  %786 = vmatpush1.msra.mxu0 0.0
  %787 = vmatprep.subr.mxu0 0.0
  %788 = vmatpush1.msra.mxu0 0.0
  %789 = vmatprep.subr.mxu0 0.0
  %790 = vmatpush1.msra.mxu0 0.0
  %791 = vmatprep.subr.mxu0 0.0
  %792 = vmatpush1.msra.mxu0 0.0
  %793 = vmatprep.subr.mxu0 0.0
  %794 = vmatpush1.msra.mxu0 0.0
  %795 = vmatprep.subr.mxu0 0.0
  %796 = vmatpush1.msra.mxu0 0.0
  %797 = vmatprep.subr.mxu0 0.0
  %798 = vmatpush1.msra.mxu0 0.0
  %799 = vmatprep.subr.mxu0 0.0
  %800 = vmatpush1.msra.mxu0 0.0
  %801 = vmatprep.subr.mxu0 0.0
  %802 = vmatpush1.msra.mxu0 0.0
  %803 = vmatprep.subr.mxu0 0.0
  %804 = vmatpush1.msra.mxu0 0.0
  %805 = vmatprep.subr.mxu0 0.0
  %806 = vmatpush1.msra.mxu0 0.0
  %807 = vmatprep.subr.mxu0 0.0
  %808 = vmatpush1.msra.mxu0 %v187
  %809 = vmatprep.subr.mxu0 0.0
  %810 = vmatpush1.msra.mxu0 %v186
  %811 = vmatprep.subr.mxu0 0.0
  %812 = vmatpush1.msra.mxu0 %v185
  %813 = vmatprep.subr.mxu0 0.0
  %814 = vmatpush1.msra.mxu0 %v184
  %815 = vmatprep.subr.mxu0 0.0
  %816 = vmatpush2.msra.mxu0 0.0
  %817 = vmatprep.subr.mxu0 0.0
  %818 = vmatpush2.msra.mxu0 0.0
  %819 = vmatprep.subr.mxu0 0.0
  %820 = vmatpush2.msra.mxu0 0.0
  %821 = vmatprep.subr.mxu0 0.0
  %822 = vmatpush2.msra.mxu0 0.0
  %823 = vmatprep.subr.mxu0 0.0
  %824 = vmatpush2.msra.mxu0 0.0
  %825 = vmatprep.subr.mxu0 0.0
  %826 = vmatpush2.msra.mxu0 0.0
  %827 = vmatprep.subr.mxu0 0.0
  %828 = vmatpush2.msra.mxu0 0.0
  %829 = vmatprep.subr.mxu0 0.0
  %830 = vmatpush2.msra.mxu0 0.0
  %831 = vmatprep.subr.mxu0 0.0
  %832 = vmatpush2.msra.mxu0 0.0
  %833 = vmatprep.subr.mxu0 0.0
  %834 = vmatpush2.msra.mxu0 0.0
  %835 = vmatprep.subr.mxu0 0.0
  %836 = vmatpush2.msra.mxu0 0.0
  %837 = vmatprep.subr.mxu0 0.0
  %838 = vmatpush2.msra.mxu0 0.0
  %839 = vmatprep.subr.mxu0 0.0
  %840 = vmatpush2.msra.mxu0 0.0
  %841 = vmatprep.subr.mxu0 0.0
  %842 = vmatpush2.msra.mxu0 0.0
  %843 = vmatprep.subr.mxu0 0.0
  %844 = vmatpush2.msra.mxu0 0.0
  %845 = vmatprep.subr.mxu0 0.0
  %846 = vmatpush2.msra.mxu0 0.0
  %847 = vmatprep.mubr.f32.mxu0 0.0
  %848 = vmatmul.mubr.f32.gmra.mxu0 %v781
  %v849 = vpop.f32.mrf.mxu0
  %v850 = vadd.f32 0.0, %v849
  %v851 = vpop.f32.mrf.mxu0
  %852 = vdwg.mxu0
  %v853 = vadd.f32 %v778, %v850
  %v854 = vxor.u32 %v853, 2147483648
  %v855 = vmul.f32 %v854, 1.442695
  %v856 = vpow.pop %v855
  %v857 = vadd.f32 %v856, 1.0
  %v858 = vrcp.pop %v857
  %v859 = vmul.f32 1.0, %v858
  %v860 = vtanh.pop %v853
  %v861 = vld [vmem:[#allocation3] sm:$0xff]
  %863 = vrot.lane.b32.xlu0 %v861, 32
  %v864 = vpop.permute.xlu0 %863
  %v866 = vmul.f32 %v859, %v864
  %868 = vrot.lane.b32.xlu0 %v860, 64
  %v869 = vpop.permute.xlu0 %868
  %v871 = vmul.f32 %v859, %v869
  %873 = vrot.lane.b32.xlu0 %v871, 32
  %v874 = vpop.permute.xlu0 %873
  %v876 = vadd.f32 %v866, %v874
  %v877 = vtanh.pop %v876
  %879 = vrot.lane.b32.xlu0 %v877, 64
  %v880 = vpop.permute.xlu0 %879
  %v882 = vmul.f32 %v859, %v880
  %884 = vrot.lane.b32.xlu0 %v876, 96
  %v885 = vpop.permute.xlu0 %884
  %887 = vst.msk [vmem:[#allocation3] sm:$0xff] %vm190, %v885
  %889 = vrot.lane.b32.xlu0 %v882, 32
  %v890 = vpop.permute.xlu0 %889
  %892 = vst.msk [vmem:[#allocation2] sm:$0xff] %vm190, %v890
  %s893 = scalar_lea.vmem [#allocation5], 40
  %894 = vst.msk [vmem:[%s893] sm:$0xff] %vm190, %v890
  %s895 = scalar_lea.vmem [#allocation4], 48
  %v896 = vld [vmem:[%s895] sm:$0xff]
  %v897 = vld [vmem:[#allocation2] sm:$0xff]
  %v899 = vsel %vm190, %v897, 0
  %901 = vmatprep.subr.mxu0 0.0
  %902 = vmatpush1.msra.mxu0 0.0
  %903 = vmatprep.subr.mxu0 0.0
  %904 = vmatpush1.msra.mxu0 0.0
  %905 = vmatprep.subr.mxu0 0.0
  %906 = vmatpush1.msra.mxu0 0.0
  %907 = vmatprep.subr.mxu0 0.0
  %908 = vmatpush1.msra.mxu0 0.0
  %909 = vmatprep.subr.mxu0 0.0
  %910 = vmatpush1.msra.mxu0 0.0
  %911 = vmatprep.subr.mxu0 0.0
  %912 = vmatpush1.msra.mxu0 0.0
  %913 = vmatprep.subr.mxu0 0.0
  %914 = vmatpush1.msra.mxu0 0.0
  %915 = vmatprep.subr.mxu0 0.0
  %916 = vmatpush1.msra.mxu0 0.0
  %917 = vmatprep.subr.mxu0 0.0
  %918 = vmatpush1.msra.mxu0 0.0
  %919 = vmatprep.subr.mxu0 0.0
  %920 = vmatpush1.msra.mxu0 0.0
  %921 = vmatprep.subr.mxu0 0.0
  %922 = vmatpush1.msra.mxu0 0.0
  %923 = vmatprep.subr.mxu0 0.0
  %924 = vmatpush1.msra.mxu0 0.0
  %925 = vmatprep.subr.mxu0 0.0
  %926 = vmatpush1.msra.mxu0 %v187
  %927 = vmatprep.subr.mxu0 0.0
  %928 = vmatpush1.msra.mxu0 %v186
  %929 = vmatprep.subr.mxu0 0.0
  %930 = vmatpush1.msra.mxu0 %v185
  %931 = vmatprep.subr.mxu0 0.0
  %932 = vmatpush1.msra.mxu0 %v184
  %933 = vmatprep.subr.mxu0 0.0
  %934 = vmatpush2.msra.mxu0 0.0
  %935 = vmatprep.subr.mxu0 0.0
  %936 = vmatpush2.msra.mxu0 0.0
  %937 = vmatprep.subr.mxu0 0.0
  %938 = vmatpush2.msra.mxu0 0.0
  %939 = vmatprep.subr.mxu0 0.0
  %940 = vmatpush2.msra.mxu0 0.0
  %941 = vmatprep.subr.mxu0 0.0
  %942 = vmatpush2.msra.mxu0 0.0
  %943 = vmatprep.subr.mxu0 0.0
  %944 = vmatpush2.msra.mxu0 0.0
  %945 = vmatprep.subr.mxu0 0.0
  %946 = vmatpush2.msra.mxu0 0.0
  %947 = vmatprep.subr.mxu0 0.0
  %948 = vmatpush2.msra.mxu0 0.0
  %949 = vmatprep.subr.mxu0 0.0
  %950 = vmatpush2.msra.mxu0 0.0
  %951 = vmatprep.subr.mxu0 0.0
  %952 = vmatpush2.msra.mxu0 0.0
  %953 = vmatprep.subr.mxu0 0.0
  %954 = vmatpush2.msra.mxu0 0.0
  %955 = vmatprep.subr.mxu0 0.0
  %956 = vmatpush2.msra.mxu0 0.0
  %957 = vmatprep.subr.mxu0 0.0
  %958 = vmatpush2.msra.mxu0 0.0
  %959 = vmatprep.subr.mxu0 0.0
  %960 = vmatpush2.msra.mxu0 0.0
  %961 = vmatprep.subr.mxu0 0.0
  %962 = vmatpush2.msra.mxu0 0.0
  %963 = vmatprep.subr.mxu0 0.0
  %964 = vmatpush2.msra.mxu0 0.0
  %965 = vmatprep.mubr.f32.mxu0 0.0
  %966 = vmatmul.mubr.f32.gmra.mxu0 %v899
  %v967 = vpop.f32.mrf.mxu0
  %v968 = vadd.f32 0.0, %v967
  %v969 = vpop.f32.mrf.mxu0
  %970 = vdwg.mxu0
  %v971 = vadd.f32 %v896, %v968
  %v972 = vxor.u32 %v971, 2147483648
  %v973 = vmul.f32 %v972, 1.442695
  %v974 = vpow.pop %v973
  %v975 = vadd.f32 %v974, 1.0
  %v976 = vrcp.pop %v975
  %v977 = vmul.f32 1.0, %v976
  %v978 = vtanh.pop %v971
  %v979 = vld [vmem:[#allocation3] sm:$0xff]
  %981 = vrot.lane.b32.xlu0 %v979, 32
  %v982 = vpop.permute.xlu0 %981
  %v984 = vmul.f32 %v977, %v982
  %986 = vrot.lane.b32.xlu0 %v978, 64
  %v987 = vpop.permute.xlu0 %986
  %v989 = vmul.f32 %v977, %v987
  %991 = vrot.lane.b32.xlu0 %v989, 32
  %v992 = vpop.permute.xlu0 %991
  %v994 = vadd.f32 %v984, %v992
  %v995 = vtanh.pop %v994
  %997 = vrot.lane.b32.xlu0 %v995, 64
  %v998 = vpop.permute.xlu0 %997
  %v1000 = vmul.f32 %v977, %v998
  %1002 = vrot.lane.b32.xlu0 %v994, 96
  %v1003 = vpop.permute.xlu0 %1002
  %1005 = vst.msk [vmem:[#allocation3] sm:$0xff] %vm190, %v1003
  %1007 = vrot.lane.b32.xlu0 %v1000, 32
  %v1008 = vpop.permute.xlu0 %1007
  %1010 = vst.msk [vmem:[#allocation2] sm:$0xff] %vm190, %v1008
  %s1011 = scalar_lea.vmem [#allocation5], 48
  %1012 = vst.msk [vmem:[%s1011] sm:$0xff] %vm190, %v1008
  %s1013 = scalar_lea.vmem [#allocation4], 56
  %v1014 = vld [vmem:[%s1013] sm:$0xff]
  %v1015 = vld [vmem:[#allocation2] sm:$0xff]
  %v1017 = vsel %vm190, %v1015, 0
  %1019 = vmatprep.subr.mxu0 0.0
  %1020 = vmatpush1.msra.mxu0 0.0
  %1021 = vmatprep.subr.mxu0 0.0
  %1022 = vmatpush1.msra.mxu0 0.0
  %1023 = vmatprep.subr.mxu0 0.0
  %1024 = vmatpush1.msra.mxu0 0.0
  %1025 = vmatprep.subr.mxu0 0.0
  %1026 = vmatpush1.msra.mxu0 0.0
  %1027 = vmatprep.subr.mxu0 0.0
  %1028 = vmatpush1.msra.mxu0 0.0
  %1029 = vmatprep.subr.mxu0 0.0
  %1030 = vmatpush1.msra.mxu0 0.0
  %1031 = vmatprep.subr.mxu0 0.0
  %1032 = vmatpush1.msra.mxu0 0.0
  %1033 = vmatprep.subr.mxu0 0.0
  %1034 = vmatpush1.msra.mxu0 0.0
  %1035 = vmatprep.subr.mxu0 0.0
  %1036 = vmatpush1.msra.mxu0 0.0
  %1037 = vmatprep.subr.mxu0 0.0
  %1038 = vmatpush1.msra.mxu0 0.0
  %1039 = vmatprep.subr.mxu0 0.0
  %1040 = vmatpush1.msra.mxu0 0.0
  %1041 = vmatprep.subr.mxu0 0.0
  %1042 = vmatpush1.msra.mxu0 0.0
  %1043 = vmatprep.subr.mxu0 0.0
  %1044 = vmatpush1.msra.mxu0 %v187
  %1045 = vmatprep.subr.mxu0 0.0
  %1046 = vmatpush1.msra.mxu0 %v186
  %1047 = vmatprep.subr.mxu0 0.0
  %1048 = vmatpush1.msra.mxu0 %v185
  %1049 = vmatprep.subr.mxu0 0.0
  %1050 = vmatpush1.msra.mxu0 %v184
  %1051 = vmatprep.subr.mxu0 0.0
  %1052 = vmatpush2.msra.mxu0 0.0
  %1053 = vmatprep.subr.mxu0 0.0
  %1054 = vmatpush2.msra.mxu0 0.0
  %1055 = vmatprep.subr.mxu0 0.0
  %1056 = vmatpush2.msra.mxu0 0.0
  %1057 = vmatprep.subr.mxu0 0.0
  %1058 = vmatpush2.msra.mxu0 0.0
  %1059 = vmatprep.subr.mxu0 0.0
  %1060 = vmatpush2.msra.mxu0 0.0
  %1061 = vmatprep.subr.mxu0 0.0
  %1062 = vmatpush2.msra.mxu0 0.0
  %1063 = vmatprep.subr.mxu0 0.0
  %1064 = vmatpush2.msra.mxu0 0.0
  %1065 = vmatprep.subr.mxu0 0.0
  %1066 = vmatpush2.msra.mxu0 0.0
  %1067 = vmatprep.subr.mxu0 0.0
  %1068 = vmatpush2.msra.mxu0 0.0
  %1069 = vmatprep.subr.mxu0 0.0
  %1070 = vmatpush2.msra.mxu0 0.0
  %1071 = vmatprep.subr.mxu0 0.0
  %1072 = vmatpush2.msra.mxu0 0.0
  %1073 = vmatprep.subr.mxu0 0.0
  %1074 = vmatpush2.msra.mxu0 0.0
  %1075 = vmatprep.subr.mxu0 0.0
  %1076 = vmatpush2.msra.mxu0 0.0
  %1077 = vmatprep.subr.mxu0 0.0
  %1078 = vmatpush2.msra.mxu0 0.0
  %1079 = vmatprep.subr.mxu0 0.0
  %1080 = vmatpush2.msra.mxu0 0.0
  %1081 = vmatprep.subr.mxu0 0.0
  %1082 = vmatpush2.msra.mxu0 0.0
  %1083 = vmatprep.mubr.f32.mxu0 0.0
  %1084 = vmatmul.mubr.f32.gmra.mxu0 %v1017
  %v1085 = vpop.f32.mrf.mxu0
  %v1086 = vadd.f32 0.0, %v1085
  %v1087 = vpop.f32.mrf.mxu0
  %1088 = vdwg.mxu0
  %v1089 = vadd.f32 %v1014, %v1086
  %v1090 = vxor.u32 %v1089, 2147483648
  %v1091 = vmul.f32 %v1090, 1.442695
  %v1092 = vpow.pop %v1091
  %v1093 = vadd.f32 %v1092, 1.0
  %v1094 = vrcp.pop %v1093
  %v1095 = vmul.f32 1.0, %v1094
  %v1096 = vtanh.pop %v1089
  %v1097 = vld [vmem:[#allocation3] sm:$0xff]
  %1099 = vrot.lane.b32.xlu0 %v1097, 32
  %v1100 = vpop.permute.xlu0 %1099
  %v1102 = vmul.f32 %v1095, %v1100
  %1104 = vrot.lane.b32.xlu0 %v1096, 64
  %v1105 = vpop.permute.xlu0 %1104
  %v1107 = vmul.f32 %v1095, %v1105
  %1109 = vrot.lane.b32.xlu0 %v1107, 32
  %v1110 = vpop.permute.xlu0 %1109
  %v1112 = vadd.f32 %v1102, %v1110
  %v1113 = vtanh.pop %v1112
  %1115 = vrot.lane.b32.xlu0 %v1113, 64
  %v1116 = vpop.permute.xlu0 %1115
  %v1118 = vmul.f32 %v1095, %v1116
  %1120 = vrot.lane.b32.xlu0 %v1112, 96
  %v1121 = vpop.permute.xlu0 %1120
  %1123 = vst.msk [vmem:[#allocation3] sm:$0xff] %vm190, %v1121
  %1125 = vrot.lane.b32.xlu0 %v1118, 32
  %v1126 = vpop.permute.xlu0 %1125
  %1128 = vst.msk [vmem:[#allocation2] sm:$0xff] %vm190, %v1126
  %s1129 = scalar_lea.vmem [#allocation5], 56
  %1130 = vst.msk [vmem:[%s1129] sm:$0xff] %vm190, %v1126
  %v1131 = vld [vmem:[#allocation5] sm:$0xff]
  %v1132 = vld [vmem:[#allocation5 + $0x8] sm:$0xff]
  %v1133 = vld [vmem:[#allocation5 + $0x10] sm:$0xff]
  %v1134 = vld [vmem:[#allocation5 + $0x18] sm:$0xff]
  %v1135 = vld [vmem:[#allocation5 + $0x20] sm:$0xff]
  %v1136 = vld [vmem:[#allocation5 + $0x28] sm:$0xff]
  %v1137 = vld [vmem:[#allocation5 + $0x30] sm:$0xff]
  %v1138 = vld [vmem:[#allocation5 + $0x38] sm:$0xff]
  %v1139 = vld [vmem:[%s4] sm:$0xff]
  %v1140 = vld [vmem:[%s4 + $0x8] sm:$0xff]
  %v1141 = vld [vmem:[%s4 + $0x10] sm:$0xff]
  %v1142 = vld [vmem:[%s4 + $0x18] sm:$0xff]
  %v1143 = vld [vmem:[%s5] sm:$0x1]
  %v1145 = vlaneseq
  %v1146 = vshrl.u32 %v1145, 7
  %v1147 = vsub.s32 0, %v1146
  %v1148 = vrot.slane %v1143, %v1147
  %v1151 = vsel %vm190, %v1131, 0
  %v1154 = vsel %vm190, %v1132, 0
  %v1157 = vsel %vm190, %v1133, 0
  %v1160 = vsel %vm190, %v1134, 0
  %v1163 = vsel %vm190, %v1135, 0
  %v1166 = vsel %vm190, %v1136, 0
  %v1169 = vsel %vm190, %v1137, 0
  %v1172 = vsel %vm190, %v1138, 0
  %1174 = vmatprep.subr.mxu0 0.0
  %1175 = vmatpush1.msra.mxu0 0.0
  %1176 = vmatprep.subr.mxu0 0.0
  %1177 = vmatpush1.msra.mxu0 0.0
  %1178 = vmatprep.subr.mxu0 0.0
  %1179 = vmatpush1.msra.mxu0 0.0
  %1180 = vmatprep.subr.mxu0 0.0
  %1181 = vmatpush1.msra.mxu0 0.0
  %1182 = vmatprep.subr.mxu0 0.0
  %1183 = vmatpush1.msra.mxu0 0.0
  %1184 = vmatprep.subr.mxu0 0.0
  %1185 = vmatpush1.msra.mxu0 0.0
  %1186 = vmatprep.subr.mxu0 0.0
  %1187 = vmatpush1.msra.mxu0 0.0
  %1188 = vmatprep.subr.mxu0 0.0
  %1189 = vmatpush1.msra.mxu0 0.0
  %1190 = vmatprep.subr.mxu0 0.0
  %1191 = vmatpush1.msra.mxu0 0.0
  %1192 = vmatprep.subr.mxu0 0.0
  %1193 = vmatpush1.msra.mxu0 0.0
  %1194 = vmatprep.subr.mxu0 0.0
  %1195 = vmatpush1.msra.mxu0 0.0
  %1196 = vmatprep.subr.mxu0 0.0
  %1197 = vmatpush1.msra.mxu0 0.0
  %1198 = vmatprep.subr.mxu0 0.0
  %1199 = vmatpush1.msra.mxu0 %v1142
  %1200 = vmatprep.subr.mxu0 0.0
  %1201 = vmatpush1.msra.mxu0 %v1141
  %1202 = vmatprep.subr.mxu0 0.0
  %1203 = vmatpush1.msra.mxu0 %v1140
  %1204 = vmatprep.subr.mxu0 0.0
  %1205 = vmatpush1.msra.mxu0 %v1139
  %1206 = vmatprep.subr.mxu0 0.0
  %1207 = vmatpush2.msra.mxu0 0.0
  %1208 = vmatprep.subr.mxu0 0.0
  %1209 = vmatpush2.msra.mxu0 0.0
  %1210 = vmatprep.subr.mxu0 0.0
  %1211 = vmatpush2.msra.mxu0 0.0
  %1212 = vmatprep.subr.mxu0 0.0
  %1213 = vmatpush2.msra.mxu0 0.0
  %1214 = vmatprep.subr.mxu0 0.0
  %1215 = vmatpush2.msra.mxu0 0.0
  %1216 = vmatprep.subr.mxu0 0.0
  %1217 = vmatpush2.msra.mxu0 0.0
  %1218 = vmatprep.subr.mxu0 0.0
  %1219 = vmatpush2.msra.mxu0 0.0
  %1220 = vmatprep.subr.mxu0 0.0
  %1221 = vmatpush2.msra.mxu0 0.0
  %1222 = vmatprep.subr.mxu0 0.0
  %1223 = vmatpush2.msra.mxu0 0.0
  %1224 = vmatprep.subr.mxu0 0.0
  %1225 = vmatpush2.msra.mxu0 0.0
  %1226 = vmatprep.subr.mxu0 0.0
  %1227 = vmatpush2.msra.mxu0 0.0
  %1228 = vmatprep.subr.mxu0 0.0
  %1229 = vmatpush2.msra.mxu0 0.0
  %1230 = vmatprep.subr.mxu0 0.0
  %1231 = vmatpush2.msra.mxu0 0.0
  %1232 = vmatprep.subr.mxu0 0.0
  %1233 = vmatpush2.msra.mxu0 0.0
  %1234 = vmatprep.subr.mxu0 0.0
  %1235 = vmatpush2.msra.mxu0 0.0
  %1236 = vmatprep.subr.mxu0 0.0
  %1237 = vmatpush2.msra.mxu0 0.0
  %1238 = vmatprep.mubr.f32.mxu0 0.0
  %1239 = vmatmul.mubr.f32.gmra.mxu0 %v1151
  %v1240 = vpop.f32.mrf.mxu0
  %v1241 = vadd.f32 %v1148, %v1240
  %v1242 = vpop.f32.mrf.mxu0
  %1243 = vmatprep.mubr.f32.mxu0 0.0
  %1244 = vmatmul.mubr.f32.gmra.mxu0 %v1154
  %v1245 = vpop.f32.mrf.mxu0
  %v1246 = vadd.f32 %v1148, %v1245
  %v1247 = vpop.f32.mrf.mxu0
  %1248 = vmatprep.mubr.f32.mxu0 0.0
  %1249 = vmatmul.mubr.f32.gmra.mxu0 %v1157
  %v1250 = vpop.f32.mrf.mxu0
  %v1251 = vadd.f32 %v1148, %v1250
  %v1252 = vpop.f32.mrf.mxu0
  %1253 = vmatprep.mubr.f32.mxu0 0.0
  %1254 = vmatmul.mubr.f32.gmra.mxu0 %v1160
  %v1255 = vpop.f32.mrf.mxu0
  %v1256 = vadd.f32 %v1148, %v1255
  %v1257 = vpop.f32.mrf.mxu0
  %1258 = vmatprep.mubr.f32.mxu0 0.0
  %1259 = vmatmul.mubr.f32.gmra.mxu0 %v1163
  %v1260 = vpop.f32.mrf.mxu0
  %v1261 = vadd.f32 %v1148, %v1260
  %v1262 = vpop.f32.mrf.mxu0
  %1263 = vmatprep.mubr.f32.mxu0 0.0
  %1264 = vmatmul.mubr.f32.gmra.mxu0 %v1166
  %v1265 = vpop.f32.mrf.mxu0
  %v1266 = vadd.f32 %v1148, %v1265
  %v1267 = vpop.f32.mrf.mxu0
  %1268 = vmatprep.mubr.f32.mxu0 0.0
  %1269 = vmatmul.mubr.f32.gmra.mxu0 %v1169
  %v1270 = vpop.f32.mrf.mxu0
  %v1271 = vadd.f32 %v1148, %v1270
  %v1272 = vpop.f32.mrf.mxu0
  %1273 = vmatprep.mubr.f32.mxu0 0.0
  %1274 = vmatmul.mubr.f32.gmra.mxu0 %v1172
  %v1275 = vpop.f32.mrf.mxu0
  %v1276 = vadd.f32 %v1148, %v1275
  %v1277 = vpop.f32.mrf.mxu0
  %1278 = vdwg.mxu0
  %v1279 = vxor.u32 %v1241, 2147483648
  %v1280 = vxor.u32 %v1246, 2147483648
  %v1281 = vxor.u32 %v1251, 2147483648
  %v1282 = vxor.u32 %v1256, 2147483648
  %v1283 = vxor.u32 %v1261, 2147483648
  %v1284 = vxor.u32 %v1266, 2147483648
  %v1285 = vxor.u32 %v1271, 2147483648
  %v1286 = vxor.u32 %v1276, 2147483648
  %v1287 = vmul.f32 %v1279, 1.442695
  %v1288 = vpow.pop %v1287
  %v1289 = vmul.f32 %v1280, 1.442695
  %v1290 = vpow.pop %v1289
  %v1291 = vmul.f32 %v1281, 1.442695
  %v1292 = vpow.pop %v1291
  %v1293 = vmul.f32 %v1282, 1.442695
  %v1294 = vpow.pop %v1293
  %v1295 = vmul.f32 %v1283, 1.442695
  %v1296 = vpow.pop %v1295
  %v1297 = vmul.f32 %v1284, 1.442695
  %v1298 = vpow.pop %v1297
  %v1299 = vmul.f32 %v1285, 1.442695
  %v1300 = vpow.pop %v1299
  %v1301 = vmul.f32 %v1286, 1.442695
  %v1302 = vpow.pop %v1301
  %v1303 = vadd.f32 %v1288, 1.0
  %v1304 = vadd.f32 %v1290, 1.0
  %v1305 = vadd.f32 %v1292, 1.0
  %v1306 = vadd.f32 %v1294, 1.0
  %v1307 = vadd.f32 %v1296, 1.0
  %v1308 = vadd.f32 %v1298, 1.0
  %v1309 = vadd.f32 %v1300, 1.0
  %v1310 = vadd.f32 %v1302, 1.0
  %v1311 = vrcp.pop %v1303
  %v1312 = vmul.f32 1.0, %v1311
  %v1313 = vrcp.pop %v1304
  %v1314 = vmul.f32 1.0, %v1313
  %v1315 = vrcp.pop %v1305
  %v1316 = vmul.f32 1.0, %v1315
  %v1317 = vrcp.pop %v1306
  %v1318 = vmul.f32 1.0, %v1317
  %v1319 = vrcp.pop %v1307
  %v1320 = vmul.f32 1.0, %v1319
  %v1321 = vrcp.pop %v1308
  %v1322 = vmul.f32 1.0, %v1321
  %v1323 = vrcp.pop %v1309
  %v1324 = vmul.f32 1.0, %v1323
  %v1325 = vrcp.pop %v1310
  %v1326 = vmul.f32 1.0, %v1325
  %vm1327 = vcmask 31744
  %1328 = vst.msk [vmem:[%s6] sm:$0xff] %vm1327, %v1312
  %1329 = vst.msk [vmem:[%s6 + $0x8] sm:$0xff] %vm1327, %v1314
  %1330 = vst.msk [vmem:[%s6 + $0x10] sm:$0xff] %vm1327, %v1316
  %1331 = vst.msk [vmem:[%s6 + $0x18] sm:$0xff] %vm1327, %v1318
  %1332 = vst.msk [vmem:[%s6 + $0x20] sm:$0xff] %vm1327, %v1320
  %1333 = vst.msk [vmem:[%s6 + $0x28] sm:$0xff] %vm1327, %v1322
  %1334 = vst.msk [vmem:[%s6 + $0x30] sm:$0xff] %vm1327, %v1324
  %1335 = vst.msk [vmem:[%s6 + $0x38] sm:$0xff] %vm1327, %v1326
  // Predicated region
  $region30: #{combine_stack_forward.1} parent=0 // pred_check
    _
  $region31: #{combine_stack_forward.1} parent=0 // pred_check_branch
    %1337 = sbr.rel (0) target = $region33
  $region32: #{combine_stack_forward.1} parent=0 // pred_region
    _
  $region33: #{combine_stack_forward.1} parent=0 // pred_fallthru
    _
  // Predicated region
  $region34: #{combine_stack_forward.1} parent=0 // pred_check
    _
  $region35: #{combine_stack_forward.1} parent=0 // pred_check_branch
    %1339 = sbr.rel (0) target = $region37
  $region36: #{combine_stack_forward.1} parent=0 // pred_region
    _
  $region37: #{combine_stack_forward.1} parent=0 // pred_fallthru
    _

</llo_original>
